<compile_context>
chip_gen: v6e
topology: v6e:2x2x1
jax: 0.10.0
libtpu: 0.0.40
codegen_flags: <defaults>
</compile_context>

<pallas_src>
import functools

import jax
import jax.numpy as jnp
from jax.experimental import pallas as pl
from jax.experimental.pallas import tpu as pltpu

# Model hyper-parameters (match the nn.Module __init__ arguments).
Q_SIZE = 32
K_SIZE = 32
EMB = 32
HEADS = 8
HEAD_DIM = EMB // HEADS  # self.s


def rel_attn_kernel(qf_ref, kf_ref, wq_ref, wkv_ref, wu_ref, bu_ref, o_ref, *,
                    bt, q_t, k_t, heads, head_dim):
    emb = heads * head_dim
    f32 = jnp.float32

    # When the wrapper feeds bf16 inputs/weights (v6e/v7x), run MXU ops in bf16;
    # all softmax / accumulation math stays f32. Identity (no-op) in f32 mode.
    bf16_mxu = qf_ref.dtype == jnp.bfloat16
    cast = (lambda x: x.astype(jnp.bfloat16)) if bf16_mxu else (lambda x: x)

    # ---- Fused projections: M = bt*T rows per MXU push; K and V share one matmul.
    q2d = jnp.dot(qf_ref[...], wq_ref[...], preferred_element_type=f32)    # (bt*q_t, emb)
    kv2d = jnp.dot(kf_ref[...], wkv_ref[...], preferred_element_type=f32)  # (bt*k_t, 2*emb)

    q3 = q2d.reshape(bt, q_t, emb)
    kv3 = kv2d.reshape(bt, k_t, 2 * emb)

    # ---- All-head scores, stacked along the leading (cheap, untiled) axis so the
    #      softmax instruction sequence is issued exactly once for all heads.
    scores = jnp.concatenate(
        [jnp.einsum('bqd,bkd->bqk',
                    cast(q3[:, :, h * head_dim:(h + 1) * head_dim]),
                    cast(kv3[:, :, h * head_dim:(h + 1) * head_dim]),
                    preferred_element_type=f32)
         for h in range(heads)],
        axis=0)                                                            # (heads*bt, q_t, k_t)

    m = jnp.max(scores, axis=-1, keepdims=True)
    e = jnp.exp(scores - m)
    p = e * pl.reciprocal(jnp.sum(e, axis=-1, keepdims=True), approx=True)  # softmax over keys

    # ---- AV + unifyheads, accumulated per head (unifyheads is linear over head
    #      blocks) -> no scratch slab, no masked 4-lane stores, no VMEM round-trip.
    wu_all = wu_ref[...]                                                   # (emb, emb), loaded once
    out2d = jnp.zeros((bt * q_t, emb), f32)
    for h in range(heads):
        lo = h * head_dim
        hi = lo + head_dim
        ph = p[h * bt:(h + 1) * bt]                                        # (bt, q_t, k_t) leading-dim slice
        vh = kv3[:, :, emb + lo:emb + hi]                                  # (bt, k_t, s)
        avh = jnp.einsum('bqk,bkd->bqd', cast(ph), cast(vh),
                         preferred_element_type=f32)                       # (bt, q_t, s)
        out2d = out2d + jnp.dot(cast(avh.reshape(bt * q_t, head_dim)),
                                wu_all[lo:hi, :],
                                preferred_element_type=f32)

    o_ref[...] = (out2d + bu_ref[...]).astype(o_ref.dtype)


def relative_attention(query, key, wq, wk, wv, wu, bu, *, heads=HEADS,
                       batch_tile=32, compute_dtype=None):
    """Forward of RelativeAttention (mask=None path).

    compute_dtype=jnp.bfloat16 is recommended on v6e/v7x (bf16 MXU, half the
    input DMA bytes); softmax math stays f32 either way.
    """
    b, q_t, q_e = query.shape
    _, k_t, k_e = key.shape
    emb = wq.shape[1]
    head_dim = emb // heads
    out_dtype = query.dtype

    # ---- batch tiling -------------------------------------------------------
    #  * tile bounded by `batch_tile` to keep vreg live ranges / spills bounded
    #  * >= 2 "parallel" grid steps whenever B >= 2 so both v7x TensorCores get
    #    work (neutral on single-TC v5e/v6e: per-step overhead stays amortized)
    #  * non-divisible batches are zero-padded to a tile multiple; padded rows
    #    are finite (uniform softmax) and dropped after the call.
    if b >= 2:
        bt = min(batch_tile, pl.cdiv(b, 2))
    else:
        bt = 1
    b_pad = pl.cdiv(b, bt) * bt
    num_tiles = b_pad // bt
    # (8,128) rule: flattened (bt*T, F) blocks need bt*T % 8 == 0 unless a single
    # block covers the whole (padded) array.
    if num_tiles > 1 and ((bt * q_t) % 8 != 0 or (bt * k_t) % 8 != 0):
        bt, b_pad, num_tiles = b, b, 1

    if b_pad != b:
        pad = b_pad - b
        query = jnp.pad(query, ((0, pad), (0, 0), (0, 0)))
        key = jnp.pad(key, ((0, pad), (0, 0), (0, 0)))

    # Wrapper-side flattening so the projection matmuls see M = bt*T rows;
    # K and V weights fused into a single (k_e, 2*emb) matrix.
    qf = query.reshape(b_pad * q_t, q_e)
    kf = key.reshape(b_pad * k_t, k_e)
    wkv = jnp.concatenate([wk, wv], axis=1)
    wq_in, wu_in = wq, wu
    if compute_dtype is not None:
        qf = qf.astype(compute_dtype)
        kf = kf.astype(compute_dtype)
        wq_in = wq_in.astype(compute_dtype)
        wkv = wkv.astype(compute_dtype)
        wu_in = wu_in.astype(compute_dtype)

    kernel = functools.partial(rel_attn_kernel, bt=bt, q_t=q_t, k_t=k_t,
                               heads=heads, head_dim=head_dim)

    out_flat = pl.pallas_call(
        kernel,
        out_shape=jax.ShapeDtypeStruct((b_pad * q_t, emb), out_dtype),
        grid_spec=pltpu.PrefetchScalarGridSpec(
            num_scalar_prefetch=0,
            grid=(num_tiles,),
            in_specs=[
                pl.BlockSpec((bt * q_t, q_e), lambda i: (i, 0)),   # query (flattened)
                pl.BlockSpec((bt * k_t, k_e), lambda i: (i, 0)),   # key   (flattened)
                pl.BlockSpec((q_e, emb), lambda i: (0, 0)),        # Wq        (resident)
                pl.BlockSpec((k_e, 2 * emb), lambda i: (0, 0)),    # [Wk | Wv] (resident)
                pl.BlockSpec((emb, emb), lambda i: (0, 0)),        # W_unify   (resident)
                pl.BlockSpec((1, emb), lambda i: (0, 0)),          # b_unify   (resident)
            ],
            # Output emitted as (bt*q_t, emb): out2d is already in this layout, so
            # there is no in-kernel sublane->lane retile; wrapper reshape is free.
            out_specs=pl.BlockSpec((bt * q_t, emb), lambda i: (i, 0)),
        ),
        compiler_params=pltpu.CompilerParams(
            dimension_semantics=("parallel",)),
    )(qf, kf, wq_in, wkv, wu_in, bu)

    out = out_flat.reshape(b_pad, q_t, emb)
    return out[:b] if b_pad != b else out


def _reference(query, key, wq, wk, wv, wu, bu, heads=HEADS):
    """Pure-JAX reference mirroring the PyTorch forward (mask=None)."""
    b, q_t, _ = query.shape
    _, k_t, _ = key.shape
    emb = wq.shape[1]
    s = emb // heads
    q = (query @ wq).reshape(b, q_t, heads, s)
    k = (key @ wk).reshape(b, k_t, heads, s)
    v = (key @ wv).reshape(b, k_t, heads, s)
    att_score = jnp.einsum('bind,bjnd->bijn', q, k)
    att_prob = jax.nn.softmax(att_score, axis=2)
    att_vec = jnp.einsum('bijn,bjnd->bind', att_prob, v).reshape(b, q_t, emb)
    return att_vec @ wu + bu[0]


if __name__ == "__main__":
    key0 = jax.random.PRNGKey(0)
    k_q, k_k, k_wq, k_wk, k_wv, k_wu, k_bu = jax.random.split(key0, 7)

    B, Q_T, K_T = 2, 8, 8

    query = jax.random.normal(k_q, (B, Q_T, Q_SIZE), dtype=jnp.float32)
    key = jax.random.normal(k_k, (B, K_T, K_SIZE), dtype=jnp.float32)

    # Deterministic parameter init (Linear weights stored as (in, out)).
    wq = jax.random.normal(k_wq, (Q_SIZE, EMB), dtype=jnp.float32) * 0.1
    wk = jax.random.normal(k_wk, (K_SIZE, EMB), dtype=jnp.float32) * 0.1
    wv = jax.random.normal(k_wv, (K_SIZE, EMB), dtype=jnp.float32) * 0.1
    wu = jax.random.normal(k_wu, (EMB, EMB), dtype=jnp.float32) * 0.1
    bu = jax.random.normal(k_bu, (1, EMB), dtype=jnp.float32) * 0.1

    out = relative_attention(query, key, wq, wk, wv, wu, bu)
    out = jax.block_until_ready(out)

    ref = _reference(query, key, wq, wk, wv, wu, bu)
    assert out.shape == (B, Q_T, EMB)
    # Tolerance slightly relaxed vs. exact f32 because the softmax denominator uses
    # the EUP approximate reciprocal (rel. err ~2^-12); real bugs would be O(0.1) off.
    assert jnp.allclose(out, ref, atol=2e-3, rtol=2e-3), "mismatch vs reference"

    print("KERNEL_OK")
</pallas_src>

<mosaic_0001>
module attributes {stable_mosaic.version = 11 : i64} {
  func.func @rel_attn_kernel(%arg0: i32, %arg1: memref<8x32xf32, #tpu.memory_space<vmem>>, %arg2: memref<8x32xf32, #tpu.memory_space<vmem>>, %arg3: memref<32x32xf32, #tpu.memory_space<vmem>>, %arg4: memref<32x64xf32, #tpu.memory_space<vmem>>, %arg5: memref<32x32xf32, #tpu.memory_space<vmem>>, %arg6: memref<1x32xf32, #tpu.memory_space<vmem>>, %arg7: memref<8x32xf32, #tpu.memory_space<vmem>>) attributes {dimension_semantics = [#tpu.dimension_semantics<parallel>], iteration_bounds = array<i64: 2>, scalar_prefetch = 0 : i64, scratch_operands = 0 : i64, tpu.core_type = #tpu.core_type<tc>, window_params = [{transform_indices = @transform_0, window_bounds = array<i64: 8, 32>}, {transform_indices = @transform_1, window_bounds = array<i64: 8, 32>}, {pipeline_mode = #tpu.pipeline_mode<synchronous>, transform_indices = @transform_2, window_bounds = array<i64: 32, 32>}, {pipeline_mode = #tpu.pipeline_mode<synchronous>, transform_indices = @transform_3, window_bounds = array<i64: 32, 64>}, {pipeline_mode = #tpu.pipeline_mode<synchronous>, transform_indices = @transform_4, window_bounds = array<i64: 32, 32>}, {pipeline_mode = #tpu.pipeline_mode<synchronous>, transform_indices = @transform_5, window_bounds = array<i64: 1, 32>}, {transform_indices = @transform_6, window_bounds = array<i64: 8, 32>}]} {
    %c0 = arith.constant 0 : index
    %c0_0 = arith.constant 0 : index
    %0 = vector.load %arg1[%c0, %c0_0] : memref<8x32xf32, #tpu.memory_space<vmem>>, vector<8x32xf32>
    %c0_1 = arith.constant 0 : index
    %c0_2 = arith.constant 0 : index
    %1 = vector.load %arg3[%c0_1, %c0_2] : memref<32x32xf32, #tpu.memory_space<vmem>>, vector<32x32xf32>
    %cst = arith.constant dense<0.000000e+00> : vector<8x32xf32>
    %2 = tpu.matmul %0, %1, %cst {dimension_numbers = #tpu.dot_dimension_numbers<[1], [0], [0], [1], [0, 0, 1, 1], [], []>} : vector<8x32xf32>, vector<32x32xf32>, vector<8x32xf32> -> vector<8x32xf32>
    %c0_3 = arith.constant 0 : index
    %c0_4 = arith.constant 0 : index
    %3 = vector.load %arg2[%c0_3, %c0_4] : memref<8x32xf32, #tpu.memory_space<vmem>>, vector<8x32xf32>
    %c0_5 = arith.constant 0 : index
    %c0_6 = arith.constant 0 : index
    %4 = vector.load %arg4[%c0_5, %c0_6] : memref<32x64xf32, #tpu.memory_space<vmem>>, vector<32x64xf32>
    %cst_7 = arith.constant dense<0.000000e+00> : vector<8x64xf32>
    %5 = tpu.matmul %3, %4, %cst_7 {dimension_numbers = #tpu.dot_dimension_numbers<[1], [0], [0], [1], [0, 0, 1, 1], [], []>} : vector<8x32xf32>, vector<32x64xf32>, vector<8x64xf32> -> vector<8x64xf32>
    %6 = vector.shape_cast %2 : vector<8x32xf32> to vector<1x8x32xf32>
    %7 = vector.shape_cast %5 : vector<8x64xf32> to vector<1x8x64xf32>
    %8 = vector.extract_strided_slice %6 {offsets = [0, 0, 0], sizes = [1, 8, 4], strides = [1, 1, 1]} : vector<1x8x32xf32> to vector<1x8x4xf32>
    %9 = vector.extract_strided_slice %7 {offsets = [0, 0, 0], sizes = [1, 8, 4], strides = [1, 1, 1]} : vector<1x8x64xf32> to vector<1x8x4xf32>
    "tpu.trace_start"() <{level = 10 : i32, message = "bqd,bkd->bqk"}> : () -> ()
    %cst_8 = arith.constant dense<0.000000e+00> : vector<1x8x8xf32>
    %10 = tpu.matmul %8, %9, %cst_8 {dimension_numbers = #tpu.dot_dimension_numbers<[2], [2], [1], [1], [0, 0, 0, 1, 1, 1], [0], [0]>} : vector<1x8x4xf32>, vector<1x8x4xf32>, vector<1x8x8xf32> -> vector<1x8x8xf32>
    "tpu.trace_stop"() : () -> ()
    %11 = vector.extract_strided_slice %6 {offsets = [0, 0, 4], sizes = [1, 8, 4], strides = [1, 1, 1]} : vector<1x8x32xf32> to vector<1x8x4xf32>
    %12 = vector.extract_strided_slice %7 {offsets = [0, 0, 4], sizes = [1, 8, 4], strides = [1, 1, 1]} : vector<1x8x64xf32> to vector<1x8x4xf32>
    "tpu.trace_start"() <{level = 10 : i32, message = "bqd,bkd->bqk"}> : () -> ()
    %cst_9 = arith.constant dense<0.000000e+00> : vector<1x8x8xf32>
    %13 = tpu.matmul %11, %12, %cst_9 {dimension_numbers = #tpu.dot_dimension_numbers<[2], [2], [1], [1], [0, 0, 0, 1, 1, 1], [0], [0]>} : vector<1x8x4xf32>, vector<1x8x4xf32>, vector<1x8x8xf32> -> vector<1x8x8xf32>
    "tpu.trace_stop"() : () -> ()
    %14 = vector.extract_strided_slice %6 {offsets = [0, 0, 8], sizes = [1, 8, 4], strides = [1, 1, 1]} : vector<1x8x32xf32> to vector<1x8x4xf32>
    %15 = vector.extract_strided_slice %7 {offsets = [0, 0, 8], sizes = [1, 8, 4], strides = [1, 1, 1]} : vector<1x8x64xf32> to vector<1x8x4xf32>
    "tpu.trace_start"() <{level = 10 : i32, message = "bqd,bkd->bqk"}> : () -> ()
    %cst_10 = arith.constant dense<0.000000e+00> : vector<1x8x8xf32>
    %16 = tpu.matmul %14, %15, %cst_10 {dimension_numbers = #tpu.dot_dimension_numbers<[2], [2], [1], [1], [0, 0, 0, 1, 1, 1], [0], [0]>} : vector<1x8x4xf32>, vector<1x8x4xf32>, vector<1x8x8xf32> -> vector<1x8x8xf32>
    "tpu.trace_stop"() : () -> ()
    %17 = vector.extract_strided_slice %6 {offsets = [0, 0, 12], sizes = [1, 8, 4], strides = [1, 1, 1]} : vector<1x8x32xf32> to vector<1x8x4xf32>
    %18 = vector.extract_strided_slice %7 {offsets = [0, 0, 12], sizes = [1, 8, 4], strides = [1, 1, 1]} : vector<1x8x64xf32> to vector<1x8x4xf32>
    "tpu.trace_start"() <{level = 10 : i32, message = "bqd,bkd->bqk"}> : () -> ()
    %cst_11 = arith.constant dense<0.000000e+00> : vector<1x8x8xf32>
    %19 = tpu.matmul %17, %18, %cst_11 {dimension_numbers = #tpu.dot_dimension_numbers<[2], [2], [1], [1], [0, 0, 0, 1, 1, 1], [0], [0]>} : vector<1x8x4xf32>, vector<1x8x4xf32>, vector<1x8x8xf32> -> vector<1x8x8xf32>
    "tpu.trace_stop"() : () -> ()
    %20 = vector.extract_strided_slice %6 {offsets = [0, 0, 16], sizes = [1, 8, 4], strides = [1, 1, 1]} : vector<1x8x32xf32> to vector<1x8x4xf32>
    %21 = vector.extract_strided_slice %7 {offsets = [0, 0, 16], sizes = [1, 8, 4], strides = [1, 1, 1]} : vector<1x8x64xf32> to vector<1x8x4xf32>
    "tpu.trace_start"() <{level = 10 : i32, message = "bqd,bkd->bqk"}> : () -> ()
    %cst_12 = arith.constant dense<0.000000e+00> : vector<1x8x8xf32>
    %22 = tpu.matmul %20, %21, %cst_12 {dimension_numbers = #tpu.dot_dimension_numbers<[2], [2], [1], [1], [0, 0, 0, 1, 1, 1], [0], [0]>} : vector<1x8x4xf32>, vector<1x8x4xf32>, vector<1x8x8xf32> -> vector<1x8x8xf32>
    "tpu.trace_stop"() : () -> ()
    %23 = vector.extract_strided_slice %6 {offsets = [0, 0, 20], sizes = [1, 8, 4], strides = [1, 1, 1]} : vector<1x8x32xf32> to vector<1x8x4xf32>
    %24 = vector.extract_strided_slice %7 {offsets = [0, 0, 20], sizes = [1, 8, 4], strides = [1, 1, 1]} : vector<1x8x64xf32> to vector<1x8x4xf32>
    "tpu.trace_start"() <{level = 10 : i32, message = "bqd,bkd->bqk"}> : () -> ()
    %cst_13 = arith.constant dense<0.000000e+00> : vector<1x8x8xf32>
    %25 = tpu.matmul %23, %24, %cst_13 {dimension_numbers = #tpu.dot_dimension_numbers<[2], [2], [1], [1], [0, 0, 0, 1, 1, 1], [0], [0]>} : vector<1x8x4xf32>, vector<1x8x4xf32>, vector<1x8x8xf32> -> vector<1x8x8xf32>
    "tpu.trace_stop"() : () -> ()
    %26 = vector.extract_strided_slice %6 {offsets = [0, 0, 24], sizes = [1, 8, 4], strides = [1, 1, 1]} : vector<1x8x32xf32> to vector<1x8x4xf32>
    %27 = vector.extract_strided_slice %7 {offsets = [0, 0, 24], sizes = [1, 8, 4], strides = [1, 1, 1]} : vector<1x8x64xf32> to vector<1x8x4xf32>
    "tpu.trace_start"() <{level = 10 : i32, message = "bqd,bkd->bqk"}> : () -> ()
    %cst_14 = arith.constant dense<0.000000e+00> : vector<1x8x8xf32>
    %28 = tpu.matmul %26, %27, %cst_14 {dimension_numbers = #tpu.dot_dimension_numbers<[2], [2], [1], [1], [0, 0, 0, 1, 1, 1], [0], [0]>} : vector<1x8x4xf32>, vector<1x8x4xf32>, vector<1x8x8xf32> -> vector<1x8x8xf32>
    "tpu.trace_stop"() : () -> ()
    %29 = vector.extract_strided_slice %6 {offsets = [0, 0, 28], sizes = [1, 8, 4], strides = [1, 1, 1]} : vector<1x8x32xf32> to vector<1x8x4xf32>
    %30 = vector.extract_strided_slice %7 {offsets = [0, 0, 28], sizes = [1, 8, 4], strides = [1, 1, 1]} : vector<1x8x64xf32> to vector<1x8x4xf32>
    "tpu.trace_start"() <{level = 10 : i32, message = "bqd,bkd->bqk"}> : () -> ()
    %cst_15 = arith.constant dense<0.000000e+00> : vector<1x8x8xf32>
    %31 = tpu.matmul %29, %30, %cst_15 {dimension_numbers = #tpu.dot_dimension_numbers<[2], [2], [1], [1], [0, 0, 0, 1, 1, 1], [0], [0]>} : vector<1x8x4xf32>, vector<1x8x4xf32>, vector<1x8x8xf32> -> vector<1x8x8xf32>
    "tpu.trace_stop"() : () -> ()
    %32 = tpu.concatenate %10, %13, %16, %19, %22, %25, %28, %31 in 0 : vector<1x8x8xf32>, vector<1x8x8xf32>, vector<1x8x8xf32>, vector<1x8x8xf32>, vector<1x8x8xf32>, vector<1x8x8xf32>, vector<1x8x8xf32>, vector<1x8x8xf32> -> vector<8x8x8xf32>
    %cst_16 = arith.constant dense<0xFF800000> : vector<8x8xf32>
    %33 = vector.multi_reduction <maximumf>, %32, %cst_16 [2] : vector<8x8x8xf32> to vector<8x8xf32>
    %34 = vector.shape_cast %33 : vector<8x8xf32> to vector<8x8x1xf32>
    %35 = vector.broadcast %34 : vector<8x8x1xf32> to vector<8x8x8xf32>
    %36 = arith.subf %32, %35 : vector<8x8x8xf32>
    %37 = math.exp %36 : vector<8x8x8xf32>
    %cst_17 = arith.constant dense<0.000000e+00> : vector<8x8xf32>
    %38 = vector.multi_reduction <add>, %37, %cst_17 [2] : vector<8x8x8xf32> to vector<8x8xf32>
    %39 = vector.shape_cast %38 : vector<8x8xf32> to vector<8x8x1xf32>
    %40 = tpu.reciprocal %39 {approx = true} : vector<8x8x1xf32> -> vector<8x8x1xf32>
    %41 = vector.broadcast %40 : vector<8x8x1xf32> to vector<8x8x8xf32>
    %42 = arith.mulf %37, %41 : vector<8x8x8xf32>
    %c0_18 = arith.constant 0 : index
    %c0_19 = arith.constant 0 : index
    %43 = vector.load %arg5[%c0_18, %c0_19] : memref<32x32xf32, #tpu.memory_space<vmem>>, vector<32x32xf32>
    %cst_20 = arith.constant 0.000000e+00 : f32
    %44 = vector.broadcast %cst_20 : f32 to vector<8x32xf32>
    %45 = vector.extract_strided_slice %42 {offsets = [0, 0, 0], sizes = [1, 8, 8], strides = [1, 1, 1]} : vector<8x8x8xf32> to vector<1x8x8xf32>
    %46 = vector.extract_strided_slice %7 {offsets = [0, 0, 32], sizes = [1, 8, 4], strides = [1, 1, 1]} : vector<1x8x64xf32> to vector<1x8x4xf32>
    "tpu.trace_start"() <{level = 10 : i32, message = "bqk,bkd->bqd"}> : () -> ()
    %cst_21 = arith.constant dense<0.000000e+00> : vector<1x8x4xf32>
    %47 = tpu.matmul %45, %46, %cst_21 {dimension_numbers = #tpu.dot_dimension_numbers<[2], [1], [1], [2], [0, 0, 0, 1, 1, 2], [0], [0]>} : vector<1x8x8xf32>, vector<1x8x4xf32>, vector<1x8x4xf32> -> vector<1x8x4xf32>
    "tpu.trace_stop"() : () -> ()
    %48 = vector.shape_cast %47 : vector<1x8x4xf32> to vector<8x4xf32>
    %49 = vector.extract_strided_slice %43 {offsets = [0, 0], sizes = [4, 32], strides = [1, 1]} : vector<32x32xf32> to vector<4x32xf32>
    %cst_22 = arith.constant dense<0.000000e+00> : vector<8x32xf32>
    %50 = tpu.matmul %48, %49, %cst_22 {dimension_numbers = #tpu.dot_dimension_numbers<[1], [0], [0], [1], [0, 0, 1, 1], [], []>} : vector<8x4xf32>, vector<4x32xf32>, vector<8x32xf32> -> vector<8x32xf32>
    %51 = arith.addf %44, %50 : vector<8x32xf32>
    %52 = vector.extract_strided_slice %42 {offsets = [1, 0, 0], sizes = [1, 8, 8], strides = [1, 1, 1]} : vector<8x8x8xf32> to vector<1x8x8xf32>
    %53 = vector.extract_strided_slice %7 {offsets = [0, 0, 36], sizes = [1, 8, 4], strides = [1, 1, 1]} : vector<1x8x64xf32> to vector<1x8x4xf32>
    "tpu.trace_start"() <{level = 10 : i32, message = "bqk,bkd->bqd"}> : () -> ()
    %cst_23 = arith.constant dense<0.000000e+00> : vector<1x8x4xf32>
    %54 = tpu.matmul %52, %53, %cst_23 {dimension_numbers = #tpu.dot_dimension_numbers<[2], [1], [1], [2], [0, 0, 0, 1, 1, 2], [0], [0]>} : vector<1x8x8xf32>, vector<1x8x4xf32>, vector<1x8x4xf32> -> vector<1x8x4xf32>
    "tpu.trace_stop"() : () -> ()
    %55 = vector.shape_cast %54 : vector<1x8x4xf32> to vector<8x4xf32>
    %56 = vector.extract_strided_slice %43 {offsets = [4, 0], sizes = [4, 32], strides = [1, 1]} : vector<32x32xf32> to vector<4x32xf32>
    %cst_24 = arith.constant dense<0.000000e+00> : vector<8x32xf32>
    %57 = tpu.matmul %55, %56, %cst_24 {dimension_numbers = #tpu.dot_dimension_numbers<[1], [0], [0], [1], [0, 0, 1, 1], [], []>} : vector<8x4xf32>, vector<4x32xf32>, vector<8x32xf32> -> vector<8x32xf32>
    %58 = arith.addf %51, %57 : vector<8x32xf32>
    %59 = vector.extract_strided_slice %42 {offsets = [2, 0, 0], sizes = [1, 8, 8], strides = [1, 1, 1]} : vector<8x8x8xf32> to vector<1x8x8xf32>
    %60 = vector.extract_strided_slice %7 {offsets = [0, 0, 40], sizes = [1, 8, 4], strides = [1, 1, 1]} : vector<1x8x64xf32> to vector<1x8x4xf32>
    "tpu.trace_start"() <{level = 10 : i32, message = "bqk,bkd->bqd"}> : () -> ()
    %cst_25 = arith.constant dense<0.000000e+00> : vector<1x8x4xf32>
    %61 = tpu.matmul %59, %60, %cst_25 {dimension_numbers = #tpu.dot_dimension_numbers<[2], [1], [1], [2], [0, 0, 0, 1, 1, 2], [0], [0]>} : vector<1x8x8xf32>, vector<1x8x4xf32>, vector<1x8x4xf32> -> vector<1x8x4xf32>
    "tpu.trace_stop"() : () -> ()
    %62 = vector.shape_cast %61 : vector<1x8x4xf32> to vector<8x4xf32>
    %63 = vector.extract_strided_slice %43 {offsets = [8, 0], sizes = [4, 32], strides = [1, 1]} : vector<32x32xf32> to vector<4x32xf32>
    %cst_26 = arith.constant dense<0.000000e+00> : vector<8x32xf32>
    %64 = tpu.matmul %62, %63, %cst_26 {dimension_numbers = #tpu.dot_dimension_numbers<[1], [0], [0], [1], [0, 0, 1, 1], [], []>} : vector<8x4xf32>, vector<4x32xf32>, vector<8x32xf32> -> vector<8x32xf32>
    %65 = arith.addf %58, %64 : vector<8x32xf32>
    %66 = vector.extract_strided_slice %42 {offsets = [3, 0, 0], sizes = [1, 8, 8], strides = [1, 1, 1]} : vector<8x8x8xf32> to vector<1x8x8xf32>
    %67 = vector.extract_strided_slice %7 {offsets = [0, 0, 44], sizes = [1, 8, 4], strides = [1, 1, 1]} : vector<1x8x64xf32> to vector<1x8x4xf32>
    "tpu.trace_start"() <{level = 10 : i32, message = "bqk,bkd->bqd"}> : () -> ()
    %cst_27 = arith.constant dense<0.000000e+00> : vector<1x8x4xf32>
    %68 = tpu.matmul %66, %67, %cst_27 {dimension_numbers = #tpu.dot_dimension_numbers<[2], [1], [1], [2], [0, 0, 0, 1, 1, 2], [0], [0]>} : vector<1x8x8xf32>, vector<1x8x4xf32>, vector<1x8x4xf32> -> vector<1x8x4xf32>
    "tpu.trace_stop"() : () -> ()
    %69 = vector.shape_cast %68 : vector<1x8x4xf32> to vector<8x4xf32>
    %70 = vector.extract_strided_slice %43 {offsets = [12, 0], sizes = [4, 32], strides = [1, 1]} : vector<32x32xf32> to vector<4x32xf32>
    %cst_28 = arith.constant dense<0.000000e+00> : vector<8x32xf32>
    %71 = tpu.matmul %69, %70, %cst_28 {dimension_numbers = #tpu.dot_dimension_numbers<[1], [0], [0], [1], [0, 0, 1, 1], [], []>} : vector<8x4xf32>, vector<4x32xf32>, vector<8x32xf32> -> vector<8x32xf32>
    %72 = arith.addf %65, %71 : vector<8x32xf32>
    %73 = vector.extract_strided_slice %42 {offsets = [4, 0, 0], sizes = [1, 8, 8], strides = [1, 1, 1]} : vector<8x8x8xf32> to vector<1x8x8xf32>
    %74 = vector.extract_strided_slice %7 {offsets = [0, 0, 48], sizes = [1, 8, 4], strides = [1, 1, 1]} : vector<1x8x64xf32> to vector<1x8x4xf32>
    "tpu.trace_start"() <{level = 10 : i32, message = "bqk,bkd->bqd"}> : () -> ()
    %cst_29 = arith.constant dense<0.000000e+00> : vector<1x8x4xf32>
    %75 = tpu.matmul %73, %74, %cst_29 {dimension_numbers = #tpu.dot_dimension_numbers<[2], [1], [1], [2], [0, 0, 0, 1, 1, 2], [0], [0]>} : vector<1x8x8xf32>, vector<1x8x4xf32>, vector<1x8x4xf32> -> vector<1x8x4xf32>
    "tpu.trace_stop"() : () -> ()
    %76 = vector.shape_cast %75 : vector<1x8x4xf32> to vector<8x4xf32>
    %77 = vector.extract_strided_slice %43 {offsets = [16, 0], sizes = [4, 32], strides = [1, 1]} : vector<32x32xf32> to vector<4x32xf32>
    %cst_30 = arith.constant dense<0.000000e+00> : vector<8x32xf32>
    %78 = tpu.matmul %76, %77, %cst_30 {dimension_numbers = #tpu.dot_dimension_numbers<[1], [0], [0], [1], [0, 0, 1, 1], [], []>} : vector<8x4xf32>, vector<4x32xf32>, vector<8x32xf32> -> vector<8x32xf32>
    %79 = arith.addf %72, %78 : vector<8x32xf32>
    %80 = vector.extract_strided_slice %42 {offsets = [5, 0, 0], sizes = [1, 8, 8], strides = [1, 1, 1]} : vector<8x8x8xf32> to vector<1x8x8xf32>
    %81 = vector.extract_strided_slice %7 {offsets = [0, 0, 52], sizes = [1, 8, 4], strides = [1, 1, 1]} : vector<1x8x64xf32> to vector<1x8x4xf32>
    "tpu.trace_start"() <{level = 10 : i32, message = "bqk,bkd->bqd"}> : () -> ()
    %cst_31 = arith.constant dense<0.000000e+00> : vector<1x8x4xf32>
    %82 = tpu.matmul %80, %81, %cst_31 {dimension_numbers = #tpu.dot_dimension_numbers<[2], [1], [1], [2], [0, 0, 0, 1, 1, 2], [0], [0]>} : vector<1x8x8xf32>, vector<1x8x4xf32>, vector<1x8x4xf32> -> vector<1x8x4xf32>
    "tpu.trace_stop"() : () -> ()
    %83 = vector.shape_cast %82 : vector<1x8x4xf32> to vector<8x4xf32>
    %84 = vector.extract_strided_slice %43 {offsets = [20, 0], sizes = [4, 32], strides = [1, 1]} : vector<32x32xf32> to vector<4x32xf32>
    %cst_32 = arith.constant dense<0.000000e+00> : vector<8x32xf32>
    %85 = tpu.matmul %83, %84, %cst_32 {dimension_numbers = #tpu.dot_dimension_numbers<[1], [0], [0], [1], [0, 0, 1, 1], [], []>} : vector<8x4xf32>, vector<4x32xf32>, vector<8x32xf32> -> vector<8x32xf32>
    %86 = arith.addf %79, %85 : vector<8x32xf32>
    %87 = vector.extract_strided_slice %42 {offsets = [6, 0, 0], sizes = [1, 8, 8], strides = [1, 1, 1]} : vector<8x8x8xf32> to vector<1x8x8xf32>
    %88 = vector.extract_strided_slice %7 {offsets = [0, 0, 56], sizes = [1, 8, 4], strides = [1, 1, 1]} : vector<1x8x64xf32> to vector<1x8x4xf32>
    "tpu.trace_start"() <{level = 10 : i32, message = "bqk,bkd->bqd"}> : () -> ()
    %cst_33 = arith.constant dense<0.000000e+00> : vector<1x8x4xf32>
    %89 = tpu.matmul %87, %88, %cst_33 {dimension_numbers = #tpu.dot_dimension_numbers<[2], [1], [1], [2], [0, 0, 0, 1, 1, 2], [0], [0]>} : vector<1x8x8xf32>, vector<1x8x4xf32>, vector<1x8x4xf32> -> vector<1x8x4xf32>
    "tpu.trace_stop"() : () -> ()
    %90 = vector.shape_cast %89 : vector<1x8x4xf32> to vector<8x4xf32>
    %91 = vector.extract_strided_slice %43 {offsets = [24, 0], sizes = [4, 32], strides = [1, 1]} : vector<32x32xf32> to vector<4x32xf32>
    %cst_34 = arith.constant dense<0.000000e+00> : vector<8x32xf32>
    %92 = tpu.matmul %90, %91, %cst_34 {dimension_numbers = #tpu.dot_dimension_numbers<[1], [0], [0], [1], [0, 0, 1, 1], [], []>} : vector<8x4xf32>, vector<4x32xf32>, vector<8x32xf32> -> vector<8x32xf32>
    %93 = arith.addf %86, %92 : vector<8x32xf32>
    %94 = vector.extract_strided_slice %42 {offsets = [7, 0, 0], sizes = [1, 8, 8], strides = [1, 1, 1]} : vector<8x8x8xf32> to vector<1x8x8xf32>
    %95 = vector.extract_strided_slice %7 {offsets = [0, 0, 60], sizes = [1, 8, 4], strides = [1, 1, 1]} : vector<1x8x64xf32> to vector<1x8x4xf32>
    "tpu.trace_start"() <{level = 10 : i32, message = "bqk,bkd->bqd"}> : () -> ()
    %cst_35 = arith.constant dense<0.000000e+00> : vector<1x8x4xf32>
    %96 = tpu.matmul %94, %95, %cst_35 {dimension_numbers = #tpu.dot_dimension_numbers<[2], [1], [1], [2], [0, 0, 0, 1, 1, 2], [0], [0]>} : vector<1x8x8xf32>, vector<1x8x4xf32>, vector<1x8x4xf32> -> vector<1x8x4xf32>
    "tpu.trace_stop"() : () -> ()
    %97 = vector.shape_cast %96 : vector<1x8x4xf32> to vector<8x4xf32>
    %98 = vector.extract_strided_slice %43 {offsets = [28, 0], sizes = [4, 32], strides = [1, 1]} : vector<32x32xf32> to vector<4x32xf32>
    %cst_36 = arith.constant dense<0.000000e+00> : vector<8x32xf32>
    %99 = tpu.matmul %97, %98, %cst_36 {dimension_numbers = #tpu.dot_dimension_numbers<[1], [0], [0], [1], [0, 0, 1, 1], [], []>} : vector<8x4xf32>, vector<4x32xf32>, vector<8x32xf32> -> vector<8x32xf32>
    %100 = arith.addf %93, %99 : vector<8x32xf32>
    %c0_37 = arith.constant 0 : index
    %c0_38 = arith.constant 0 : index
    %101 = vector.load %arg6[%c0_37, %c0_38] : memref<1x32xf32, #tpu.memory_space<vmem>>, vector<1x32xf32>
    %102 = vector.broadcast %101 : vector<1x32xf32> to vector<8x32xf32>
    %103 = arith.addf %100, %102 : vector<8x32xf32>
    %c0_39 = arith.constant 0 : index
    %c0_40 = arith.constant 0 : index
    %104 = vector.load %arg7[%c0_39, %c0_40] : memref<8x32xf32, #tpu.memory_space<vmem>>, vector<8x32xf32>
    tpu.vector_store %arg7[%c0_39, %c0_40], %103 {strides = array<i32>} : memref<8x32xf32, #tpu.memory_space<vmem>>, vector<8x32xf32>,
    return
  }
  func.func @transform_0(%arg0: i32) -> (i32, i32) {
    %c0_i32 = arith.constant 0 : i32
    %c0_i32_0 = arith.constant 0 : i32
    return %arg0, %c0_i32 : i32, i32
  }
  func.func @transform_1(%arg0: i32) -> (i32, i32) {
    %c0_i32 = arith.constant 0 : i32
    %c0_i32_0 = arith.constant 0 : i32
    return %arg0, %c0_i32 : i32, i32
  }
  func.func @transform_2(%arg0: i32) -> (i32, i32) {
    %c0_i32 = arith.constant 0 : i32
    %c0_i32_0 = arith.constant 0 : i32
    %c0_i32_1 = arith.constant 0 : i32
    return %c0_i32, %c0_i32_0 : i32, i32
  }
  func.func @transform_3(%arg0: i32) -> (i32, i32) {
    %c0_i32 = arith.constant 0 : i32
    %c0_i32_0 = arith.constant 0 : i32
    %c0_i32_1 = arith.constant 0 : i32
    return %c0_i32, %c0_i32_0 : i32, i32
  }
  func.func @transform_4(%arg0: i32) -> (i32, i32) {
    %c0_i32 = arith.constant 0 : i32
    %c0_i32_0 = arith.constant 0 : i32
    %c0_i32_1 = arith.constant 0 : i32
    return %c0_i32, %c0_i32_0 : i32, i32
  }
  func.func @transform_5(%arg0: i32) -> (i32, i32) {
    %c0_i32 = arith.constant 0 : i32
    %c0_i32_0 = arith.constant 0 : i32
    %c0_i32_1 = arith.constant 0 : i32
    return %c0_i32, %c0_i32_0 : i32, i32
  }
  func.func @transform_6(%arg0: i32) -> (i32, i32) {
    %c0_i32 = arith.constant 0 : i32
    %c0_i32_0 = arith.constant 0 : i32
    return %arg0, %c0_i32 : i32, i32
  }
}

</mosaic_0001>

<llo_original>
// kernel: tpu_custom_call.1
$region0: #{tpu_custom_call.1}
  #allocation0 [shape = 'u32[]', space=smem, size = 0x4, offset = 0x4, fixed_abs, tag = 'smem constant byte address 0x4 - core index']
  #allocation1 [shape = 'u32[144,128]{1,0:T(1,128)}', space=vmem, size = 0x12000, scoped, tag = 'internal scratch']
  %s0 = inlined_call_operand.hbm [shape: f32[16,32], index: 0, kind: input, shape index: {}]
  %s1 = inlined_call_operand.hbm [shape: f32[16,32], index: 1, kind: input, shape index: {}]
  %s2 = inlined_call_operand.hbm [shape: f32[32,32], index: 2, kind: input, shape index: {}]
  %s3 = inlined_call_operand.hbm [shape: f32[32,64], index: 3, kind: input, shape index: {}]
  %s4 = inlined_call_operand.hbm [shape: f32[32,32], index: 4, kind: input, shape index: {}]
  %s5 = inlined_call_operand.vmem [shape: f32[1,32], index: 5, kind: input, shape index: {}]
  %s6 = inlined_call_operand.hbm [shape: f32[16,32], index: 6, kind: output, shape index: {}]
  %s7 = sld [smem:[#allocation0]]
  $region77: #{tpu_custom_call.1} parent=0
    _
  %s9 = ssub.s32 1, %s7
  %s10 = scalar_select 0, %s9, %s7
  $region1: #{tpu_custom_call.1} parent=0
    #allocation2 [shape = 'u8[8192]{0}', space=vmem, size = 0x2000, scoped, tag = 'input window, operand 0']
    #allocation3 [shape = 's32[2]{0}', space=sflag, size = 0x8, scoped, tag = 'scoped memory for tpu_custom_call.1']
    #allocation4 [shape = 's32[2]{0}', space=sflag, size = 0x8, scoped, tag = 'scoped memory for tpu_custom_call.1']
    #allocation5 [shape = 'u8[8192]{0}', space=vmem, size = 0x2000, scoped, tag = 'input window, operand 1']
    #allocation6 [shape = 's32[2]{0}', space=sflag, size = 0x8, scoped, tag = 'scoped memory for tpu_custom_call.1']
    #allocation7 [shape = 'u8[16384]{0}', space=vmem, size = 0x4000, scoped, tag = 'input window, operand 2, single buffered']
    #allocation8 [shape = 'u8[16384]{0}', space=vmem, size = 0x4000, scoped, tag = 'input window, operand 3, single buffered']
    #allocation9 [shape = 's32[1]{0}', space=sflag, size = 0x4, scoped, tag = 'scoped memory for tpu_custom_call.1']
    #allocation10 [shape = 'u8[16384]{0}', space=vmem, size = 0x4000, scoped, tag = 'input window, operand 4, single buffered']
    #allocation11 [shape = 'u8[8192]{0}', space=vmem, size = 0x2000, scoped, tag = 'output window, operand 0']
    %11 = vsyncpa [#allocation3], 0
    %s12 = scalar_lea.sflag [#allocation3], 1
    %13 = vsyncpa %s12, 0
    %14 = vsyncpa [#allocation6], 0
    %s15 = scalar_lea.sflag [#allocation6], 1
    %16 = vsyncpa %s15, 0
    %17 = vsyncpa [#allocation9], 0
    %18 = vsyncpa [#allocation4], 0
    %s19 = scalar_lea.sflag [#allocation4], 1
    %20 = vsyncpa %s19, 0
    loop: start=0, step=1, limit=4
    $region2: #{tpu_custom_call.1} parent=1 // loop_pre_header
      _
    $region3: #{tpu_custom_call.1} parent=1 // loop_header
      %s22 = sphi 0, %s26
      %p23 = scmp.ge.s32.totalorder %s22, 4
      %s32 = sphi 0, %s34
      %s35 = sphi 0, %s32
      %s36 = sphi 0, %s35
      %s52 = sphi 0, %s36
      %s58 = sphi 0, %s60
      %s61 = sphi 0, %s58
      %s62 = sphi 0, %s61
      %s78 = sphi 0, %s62
      %s82 = sphi 0, %s82
      %s84 = sphi 0, %s82
      %s85 = sphi 0, %s84
      %s99 = sphi 0, %s85
      %s103 = sphi 0, %s103
      %s105 = sphi 0, %s103
      %s106 = sphi 0, %s105
      %s120 = sphi 0, %s106
      %s124 = sphi 0, %s124
      %s126 = sphi 0, %s124
      %s127 = sphi 0, %s126
      %s141 = sphi 0, %s127
      %s145 = sphi 0, %s145
      %s147 = sphi 0, %s145
      %s148 = sphi 0, %s147
      %s162 = sphi 0, %s148
      %s168 = sphi 0, %s170
      %s171 = sphi 0, %s168
      %s172 = sphi 0, %s171
      %s188 = sphi 0, %s172
    $region4: #{tpu_custom_call.1} parent=1 // loop_header_branch
      %25 = sbr.rel (%p23) target = $region8
    $region5: #{tpu_custom_call.1} parent=1 // loop_body
      %s27 = ssub.s32 %s22, 1
      %s28 = ssub.s32 %s22, 2
      %s29 = sadd.s32 %s22, 1
      %s30 = ssub.s32 %s22, %s29
      %p31 = scmp.eq.s32.totalorder %s30, 0
      %s33 = sadd.s32 %s32, 1
      %s34 = scalar_select %p31, %s32, %s33
      %p37 = pneg %p31
      %p38 = scmp.eq.s32.totalorder %s22, 1
      %p39 = por %p37, %p38
      %p40 = scmp.ne.s32.totalorder %s32, %s35
      %p41 = scmp.eq.s32.totalorder %s22, 0
      %p42 = por %p40, %p41
      %p43 = scmp.ne.s32.totalorder %s32, %s35
      %p44 = scmp.eq.s32.totalorder %s27, 1
      %p45 = por %p43, %p44
      %p46 = scmp.ne.s32.totalorder %s35, %s36
      %p47 = scmp.eq.s32.totalorder %s27, 0
      %p48 = por %p46, %p47
      %p49 = scmp.ne.s32.totalorder %s35, %s36
      %p50 = scmp.eq.s32.totalorder %s28, 1
      %p51 = por %p49, %p50
      %p53 = scmp.ne.s32.totalorder %s36, %s52
      %p54 = scmp.eq.s32.totalorder %s28, 0
      %p55 = por %p53, %p54
      %s56 = ssub.s32 %s22, %s29
      %p57 = scmp.eq.s32.totalorder %s56, 0
      %s59 = sadd.s32 %s58, 1
      %s60 = scalar_select %p57, %s58, %s59
      %p63 = pneg %p57
      %p64 = scmp.eq.s32.totalorder %s22, 1
      %p65 = por %p63, %p64
      %p66 = scmp.ne.s32.totalorder %s58, %s61
      %p67 = scmp.eq.s32.totalorder %s22, 0
      %p68 = por %p66, %p67
      %p69 = scmp.ne.s32.totalorder %s58, %s61
      %p70 = scmp.eq.s32.totalorder %s27, 1
      %p71 = por %p69, %p70
      %p72 = scmp.ne.s32.totalorder %s61, %s62
      %p73 = scmp.eq.s32.totalorder %s27, 0
      %p74 = por %p72, %p73
      %p75 = scmp.ne.s32.totalorder %s61, %s62
      %p76 = scmp.eq.s32.totalorder %s28, 1
      %p77 = por %p75, %p76
      %p79 = scmp.ne.s32.totalorder %s62, %s78
      %p80 = scmp.eq.s32.totalorder %s28, 0
      %p81 = por %p79, %p80
      %s83 = sadd.s32 %s82, 1
      %p86 = scmp.eq.s32.totalorder %s22, 1
      %p87 = scmp.ne.s32.totalorder %s82, %s84
      %p88 = scmp.eq.s32.totalorder %s22, 0
      %p89 = por %p87, %p88
      %p90 = scmp.ne.s32.totalorder %s82, %s84
      %p91 = scmp.eq.s32.totalorder %s27, 1
      %p92 = por %p90, %p91
      %p93 = scmp.ne.s32.totalorder %s84, %s85
      %p94 = scmp.eq.s32.totalorder %s27, 0
      %p95 = por %p93, %p94
      %p96 = scmp.ne.s32.totalorder %s84, %s85
      %p97 = scmp.eq.s32.totalorder %s28, 1
      %p98 = por %p96, %p97
      %p100 = scmp.ne.s32.totalorder %s85, %s99
      %p101 = scmp.eq.s32.totalorder %s28, 0
      %p102 = por %p100, %p101
      %s104 = sadd.s32 %s103, 1
      %p107 = scmp.eq.s32.totalorder %s22, 1
      %p108 = scmp.ne.s32.totalorder %s103, %s105
      %p109 = scmp.eq.s32.totalorder %s22, 0
      %p110 = por %p108, %p109
      %p111 = scmp.ne.s32.totalorder %s103, %s105
      %p112 = scmp.eq.s32.totalorder %s27, 1
      %p113 = por %p111, %p112
      %p114 = scmp.ne.s32.totalorder %s105, %s106
      %p115 = scmp.eq.s32.totalorder %s27, 0
      %p116 = por %p114, %p115
      %p117 = scmp.ne.s32.totalorder %s105, %s106
      %p118 = scmp.eq.s32.totalorder %s28, 1
      %p119 = por %p117, %p118
      %p121 = scmp.ne.s32.totalorder %s106, %s120
      %p122 = scmp.eq.s32.totalorder %s28, 0
      %p123 = por %p121, %p122
      %s125 = sadd.s32 %s124, 1
      %p128 = scmp.eq.s32.totalorder %s22, 1
      %p129 = scmp.ne.s32.totalorder %s124, %s126
      %p130 = scmp.eq.s32.totalorder %s22, 0
      %p131 = por %p129, %p130
      %p132 = scmp.ne.s32.totalorder %s124, %s126
      %p133 = scmp.eq.s32.totalorder %s27, 1
      %p134 = por %p132, %p133
      %p135 = scmp.ne.s32.totalorder %s126, %s127
      %p136 = scmp.eq.s32.totalorder %s27, 0
      %p137 = por %p135, %p136
      %p138 = scmp.ne.s32.totalorder %s126, %s127
      %p139 = scmp.eq.s32.totalorder %s28, 1
      %p140 = por %p138, %p139
      %p142 = scmp.ne.s32.totalorder %s127, %s141
      %p143 = scmp.eq.s32.totalorder %s28, 0
      %p144 = por %p142, %p143
      %s146 = sadd.s32 %s145, 1
      %p149 = scmp.eq.s32.totalorder %s22, 1
      %p150 = scmp.ne.s32.totalorder %s145, %s147
      %p151 = scmp.eq.s32.totalorder %s22, 0
      %p152 = por %p150, %p151
      %p153 = scmp.ne.s32.totalorder %s145, %s147
      %p154 = scmp.eq.s32.totalorder %s27, 1
      %p155 = por %p153, %p154
      %p156 = scmp.ne.s32.totalorder %s147, %s148
      %p157 = scmp.eq.s32.totalorder %s27, 0
      %p158 = por %p156, %p157
      %p159 = scmp.ne.s32.totalorder %s147, %s148
      %p160 = scmp.eq.s32.totalorder %s28, 1
      %p161 = por %p159, %p160
      %p163 = scmp.ne.s32.totalorder %s148, %s162
      %p164 = scmp.eq.s32.totalorder %s28, 0
      %p165 = por %p163, %p164
      %s166 = ssub.s32 %s22, %s29
      %p167 = scmp.eq.s32.totalorder %s166, 0
      %s169 = sadd.s32 %s168, 1
      %s170 = scalar_select %p167, %s168, %s169
      %p173 = pneg %p167
      %p174 = scmp.eq.s32.totalorder %s22, 1
      %p175 = por %p173, %p174
      %p176 = scmp.ne.s32.totalorder %s168, %s171
      %p177 = scmp.eq.s32.totalorder %s22, 0
      %p178 = por %p176, %p177
      %p179 = scmp.ne.s32.totalorder %s168, %s171
      %p180 = scmp.eq.s32.totalorder %s27, 1
      %p181 = por %p179, %p180
      %p182 = scmp.ne.s32.totalorder %s171, %s172
      %p183 = scmp.eq.s32.totalorder %s27, 0
      %p184 = por %p182, %p183
      %p185 = scmp.ne.s32.totalorder %s171, %s172
      %p186 = scmp.eq.s32.totalorder %s28, 1
      %p187 = por %p185, %p186
      %p189 = scmp.ne.s32.totalorder %s172, %s188
      %p190 = scmp.eq.s32.totalorder %s28, 0
      %p191 = por %p189, %p190
      %p192 = scmp.le.s32.totalorder 1, %s22
      %p193 = scmp.lt.s32.totalorder %s22, 3
      %p194 = pnand %p192, %p193
      %p195 = pneg %p194
      // Predicated region
      $region9: #{tpu_custom_call.1} parent=5 // pred_check
        _
      $region10: #{tpu_custom_call.1} parent=5 // pred_check_branch
        %197 = sbr.rel (%p194) target = $region12
      $region11: #{tpu_custom_call.1} parent=5 // pred_region
        %s198 = ssub.s32 %s22, 1
        // Predicated region
        $region13: #{tpu_custom_call.1} parent=11 // pred_check
          %p199 = pneg %p95
        $region14: #{tpu_custom_call.1} parent=11 // pred_check_branch
          %201 = sbr.rel (%p199) target = $region16
        $region15: #{tpu_custom_call.1} parent=11 // pred_region
          %s203 = ssub.s32 512, 512
          %204 = vsyncadd [#allocation6], %s203
          %s205 = sshll.u32 [#allocation7], 4
          %s206 = int_to_ptr.vmem [resolvable:$true] %s205
          %211 = dma.hbm_to_vmem [thread:$0]  %s2, 512, %s206, [#allocation6], 128, 128, 8
        $region16: #{tpu_custom_call.1} parent=11 // pred_fallthru
          _
        // Predicated region
        $region17: #{tpu_custom_call.1} parent=11 // pred_check
          %p212 = pneg %p116
        $region18: #{tpu_custom_call.1} parent=11 // pred_check_branch
          %214 = sbr.rel (%p212) target = $region20
        $region19: #{tpu_custom_call.1} parent=11 // pred_region
          %s216 = ssub.s32 512, 512
          %217 = vsyncadd [#allocation9], %s216
          %s218 = sshll.u32 [#allocation8], 4
          %s219 = int_to_ptr.vmem [resolvable:$true] %s218
          %224 = dma.hbm_to_vmem [thread:$0]  %s3, 512, %s219, [#allocation9], 128, 128, 8
        $region20: #{tpu_custom_call.1} parent=11 // pred_fallthru
          _
        // Predicated region
        $region21: #{tpu_custom_call.1} parent=11 // pred_check
          %p225 = pneg %p137
        $region22: #{tpu_custom_call.1} parent=11 // pred_check_branch
          %227 = sbr.rel (%p225) target = $region24
        $region23: #{tpu_custom_call.1} parent=11 // pred_region
          %s229 = ssub.s32 512, 512
          %230 = vsyncadd [#allocation9], %s229
          %s231 = sshll.u32 [#allocation10], 4
          %s232 = int_to_ptr.vmem [resolvable:$true] %s231
          %237 = dma.hbm_to_vmem [thread:$0]  %s4, 512, %s232, [#allocation9], 128, 128, 8
        $region24: #{tpu_custom_call.1} parent=11 // pred_fallthru
          _
        // Predicated region
        $region25: #{tpu_custom_call.1} parent=11 // pred_check
          %p238 = pneg %p158
        $region26: #{tpu_custom_call.1} parent=11 // pred_check_branch
          %240 = sbr.rel (%p238) target = $region28
        $region27: #{tpu_custom_call.1} parent=11 // pred_region
          _
        $region28: #{tpu_custom_call.1} parent=11 // pred_fallthru
          _
      $region12: #{tpu_custom_call.1} parent=5 // pred_fallthru
        _
      %p241 = scmp.lt.s32.totalorder %s22, 2
      // Predicated region
      $region29: #{tpu_custom_call.1} parent=5 // pred_check
        %p242 = pneg %p241
      $region30: #{tpu_custom_call.1} parent=5 // pred_check_branch
        %244 = sbr.rel (%p242) target = $region32
      $region31: #{tpu_custom_call.1} parent=5 // pred_region
        // Predicated region
        $region33: #{tpu_custom_call.1} parent=31 // pred_check
          %p245 = pneg %p42
        $region34: #{tpu_custom_call.1} parent=31 // pred_check_branch
          %247 = sbr.rel (%p245) target = $region36
        $region35: #{tpu_custom_call.1} parent=31 // pred_region
          %s248 = sand.u32 %s32, 1
          %s249 = scalar_lea.sflag [#allocation3], %s248
          %s250 = sand.u32 %s32, 1
          %s251 = smul.addr %s250, 8
          %s252 = scalar_lea.vmem [#allocation2], %s251
          %s254 = ssub.s32 128, 128
          %255 = vsyncadd %s249, %s254
          %s256 = smul.addr %s22, 128
          %s257 = scalar_lea.hbm %s0, %s256
          %s259 = sshll.u32 %s252, 4
          %s260 = int_to_ptr.vmem [resolvable:$true] %s259
          %262 = dma.hbm_to_vmem [thread:$0]  %s257, 128, %s260, %s249
        $region36: #{tpu_custom_call.1} parent=31 // pred_fallthru
          _
        // Predicated region
        $region37: #{tpu_custom_call.1} parent=31 // pred_check
          %p263 = pneg %p68
        $region38: #{tpu_custom_call.1} parent=31 // pred_check_branch
          %265 = sbr.rel (%p263) target = $region40
        $region39: #{tpu_custom_call.1} parent=31 // pred_region
          %s266 = sand.u32 %s22, 1
          %s267 = scalar_lea.sflag [#allocation6], %s266
          %s268 = sand.u32 %s58, 1
          %s269 = smul.addr %s268, 8
          %s270 = scalar_lea.vmem [#allocation5], %s269
          %s272 = ssub.s32 128, 128
          %273 = vsyncadd %s267, %s272
          %s274 = smul.addr %s22, 128
          %s275 = scalar_lea.hbm %s1, %s274
          %s277 = sshll.u32 %s270, 4
          %s278 = int_to_ptr.vmem [resolvable:$true] %s277
          %280 = dma.hbm_to_vmem [thread:$0]  %s275, 128, %s278, %s267
        $region40: #{tpu_custom_call.1} parent=31 // pred_fallthru
          _
      $region32: #{tpu_custom_call.1} parent=5 // pred_fallthru
        _
      %p281 = scmp.le.s32.totalorder 1, %s22
      %p282 = scmp.lt.s32.totalorder %s22, 3
      %p283 = pnand %p281, %p282
      %p284 = pneg %p283
      // Predicated region
      $region41: #{tpu_custom_call.1} parent=5 // pred_check
        _
      $region42: #{tpu_custom_call.1} parent=5 // pred_check_branch
        %286 = sbr.rel (%p283) target = $region44
      $region43: #{tpu_custom_call.1} parent=5 // pred_region
        %s287 = ssub.s32 %s22, 1
        %s288 = sand.u32 %s35, 1
        %s289 = scalar_lea.sflag [#allocation3], %s288
        %s290 = sand.u32 %s35, 1
        %s291 = smul.addr %s290, 8
        %s292 = scalar_lea.vmem [#allocation2], %s291
        // Predicated region
        $region45: #{tpu_custom_call.1} parent=43 // pred_check
          %p293 = pneg %p48
        $region46: #{tpu_custom_call.1} parent=43 // pred_check_branch
          %295 = sbr.rel (%p293) target = $region48
        $region47: #{tpu_custom_call.1} parent=43 // pred_region
          %296 = dma.done %s289, 128
        $region48: #{tpu_custom_call.1} parent=43 // pred_fallthru
          _
        %s297 = sand.u32 %s27, 1
        %s298 = scalar_lea.sflag [#allocation6], %s297
        %s299 = sand.u32 %s61, 1
        %s300 = smul.addr %s299, 8
        %s301 = scalar_lea.vmem [#allocation5], %s300
        // Predicated region
        $region49: #{tpu_custom_call.1} parent=43 // pred_check
          %p302 = pneg %p74
        $region50: #{tpu_custom_call.1} parent=43 // pred_check_branch
          %304 = sbr.rel (%p302) target = $region52
        $region51: #{tpu_custom_call.1} parent=43 // pred_region
          %305 = dma.done %s298, 128
        $region52: #{tpu_custom_call.1} parent=43 // pred_fallthru
          _
        // Predicated region
        $region53: #{tpu_custom_call.1} parent=43 // pred_check
          %p306 = pneg %p95
        $region54: #{tpu_custom_call.1} parent=43 // pred_check_branch
          %308 = sbr.rel (%p306) target = $region56
        $region55: #{tpu_custom_call.1} parent=43 // pred_region
          %309 = dma.done [#allocation6], 512
        $region56: #{tpu_custom_call.1} parent=43 // pred_fallthru
          _
        // Predicated region
        $region57: #{tpu_custom_call.1} parent=43 // pred_check
          %p310 = pneg %p116
        $region58: #{tpu_custom_call.1} parent=43 // pred_check_branch
          %312 = sbr.rel (%p310) target = $region60
        $region59: #{tpu_custom_call.1} parent=43 // pred_region
          %313 = dma.done [#allocation9], 512
        $region60: #{tpu_custom_call.1} parent=43 // pred_fallthru
          _
        // Predicated region
        $region61: #{tpu_custom_call.1} parent=43 // pred_check
          %p314 = pneg %p137
        $region62: #{tpu_custom_call.1} parent=43 // pred_check_branch
          %316 = sbr.rel (%p314) target = $region64
        $region63: #{tpu_custom_call.1} parent=43 // pred_region
          %317 = dma.done [#allocation9], 512
        $region64: #{tpu_custom_call.1} parent=43 // pred_fallthru
          _
        %s318 = sand.u32 %s35, 1
        %s319 = scalar_lea.sflag [#allocation3], %s318
        %s320 = sand.u32 %s35, 1
        %s321 = smul.addr %s320, 8
        %s322 = scalar_lea.vmem [#allocation2], %s321
        %p323 = pneg %p48
        %p324 = pneg %p45
        %s325 = sand.u32 %s27, 1
        %s326 = scalar_lea.sflag [#allocation6], %s325
        %s327 = sand.u32 %s61, 1
        %s328 = smul.addr %s327, 8
        %s329 = scalar_lea.vmem [#allocation5], %s328
        %p330 = pneg %p74
        %p331 = pneg %p71
        %p332 = pneg %p95
        %p333 = pneg %p92
        %p334 = pneg %p116
        %p335 = pneg %p113
        %p336 = pneg %p137
        %p337 = pneg %p134
        %p338 = pneg %p158
        %p339 = pneg %p155
        %p340 = pneg %p184
        %p341 = pneg %p181
        %s342 = sand.u32 %s171, 1
        %s343 = scalar_lea.sflag [#allocation4], %s342
        %s344 = sand.u32 %s171, 1
        %s345 = smul.addr %s344, 8
        %s346 = scalar_lea.vmem [#allocation11], %s345
        %v347 = vld [vmem:[%s292] sm:$0xff]
        %v348 = vld [vmem:[#allocation7] sm:$0xff]
        %v349 = vld [vmem:[#allocation7 + $0x8] sm:$0xff]
        %v350 = vld [vmem:[#allocation7 + $0x10] sm:$0xff]
        %v351 = vld [vmem:[#allocation7 + $0x18] sm:$0xff]
        %vm352 = vcmask 261120
        %v354 = vsel %vm352, %v347, 0
        %356 = vmatprep.subr.mxu0 0.0
        %357 = vmatpush1.msra.mxu0 0.0
        %358 = vmatprep.subr.mxu0 0.0
        %359 = vmatpush1.msra.mxu0 0.0
        %360 = vmatprep.subr.mxu0 0.0
        %361 = vmatpush1.msra.mxu0 0.0
        %362 = vmatprep.subr.mxu0 0.0
        %363 = vmatpush1.msra.mxu0 0.0
        %364 = vmatprep.subr.mxu0 0.0
        %365 = vmatpush1.msra.mxu0 0.0
        %366 = vmatprep.subr.mxu0 0.0
        %367 = vmatpush1.msra.mxu0 0.0
        %368 = vmatprep.subr.mxu0 0.0
        %369 = vmatpush1.msra.mxu0 0.0
        %370 = vmatprep.subr.mxu0 0.0
        %371 = vmatpush1.msra.mxu0 0.0
        %372 = vmatprep.subr.mxu0 0.0
        %373 = vmatpush1.msra.mxu0 0.0
        %374 = vmatprep.subr.mxu0 0.0
        %375 = vmatpush1.msra.mxu0 0.0
        %376 = vmatprep.subr.mxu0 0.0
        %377 = vmatpush1.msra.mxu0 0.0
        %378 = vmatprep.subr.mxu0 0.0
        %379 = vmatpush1.msra.mxu0 0.0
        %380 = vmatprep.subr.mxu0 0.0
        %381 = vmatpush1.msra.mxu0 %v351
        %382 = vmatprep.subr.mxu0 0.0
        %383 = vmatpush1.msra.mxu0 %v350
        %384 = vmatprep.subr.mxu0 0.0
        %385 = vmatpush1.msra.mxu0 %v349
        %386 = vmatprep.subr.mxu0 0.0
        %387 = vmatpush1.msra.mxu0 %v348
        %388 = vmatprep.subr.mxu0 0.0
        %389 = vmatpush2.msra.mxu0 0.0
        %390 = vmatprep.subr.mxu0 0.0
        %391 = vmatpush2.msra.mxu0 0.0
        %392 = vmatprep.subr.mxu0 0.0
        %393 = vmatpush2.msra.mxu0 0.0
        %394 = vmatprep.subr.mxu0 0.0
        %395 = vmatpush2.msra.mxu0 0.0
        %396 = vmatprep.subr.mxu0 0.0
        %397 = vmatpush2.msra.mxu0 0.0
        %398 = vmatprep.subr.mxu0 0.0
        %399 = vmatpush2.msra.mxu0 0.0
        %400 = vmatprep.subr.mxu0 0.0
        %401 = vmatpush2.msra.mxu0 0.0
        %402 = vmatprep.subr.mxu0 0.0
        %403 = vmatpush2.msra.mxu0 0.0
        %404 = vmatprep.subr.mxu0 0.0
        %405 = vmatpush2.msra.mxu0 0.0
        %406 = vmatprep.subr.mxu0 0.0
        %407 = vmatpush2.msra.mxu0 0.0
        %408 = vmatprep.subr.mxu0 0.0
        %409 = vmatpush2.msra.mxu0 0.0
        %410 = vmatprep.subr.mxu0 0.0
        %411 = vmatpush2.msra.mxu0 0.0
        %412 = vmatprep.subr.mxu0 0.0
        %413 = vmatpush2.msra.mxu0 0.0
        %414 = vmatprep.subr.mxu0 0.0
        %415 = vmatpush2.msra.mxu0 0.0
        %416 = vmatprep.subr.mxu0 0.0
        %417 = vmatpush2.msra.mxu0 0.0
        %418 = vmatprep.subr.mxu0 0.0
        %419 = vmatpush2.msra.mxu0 0.0
        %420 = vmatprep.mubr.f32.mxu0 0.0
        %421 = vmatmul.mubr.f32.gmra.mxu0 %v354
        %v422 = vpop.f32.mrf.mxu0
        %v423 = vadd.f32 0.0, %v422
        %v424 = vpop.f32.mrf.mxu0
        %425 = vdwg.mxu0
        %v426 = vld [vmem:[%s301] sm:$0xff]
        %v427 = vld [vmem:[#allocation8] sm:$0xff]
        %v428 = vld [vmem:[#allocation8 + $0x8] sm:$0xff]
        %v429 = vld [vmem:[#allocation8 + $0x10] sm:$0xff]
        %v430 = vld [vmem:[#allocation8 + $0x18] sm:$0xff]
        %v432 = vsel %vm352, %v426, 0
        %434 = vmatprep.subr.mxu0 0.0
        %435 = vmatpush1.msra.mxu0 0.0
        %436 = vmatprep.subr.mxu0 0.0
        %437 = vmatpush1.msra.mxu0 0.0
        %438 = vmatprep.subr.mxu0 0.0
        %439 = vmatpush1.msra.mxu0 0.0
        %440 = vmatprep.subr.mxu0 0.0
        %441 = vmatpush1.msra.mxu0 0.0
        %442 = vmatprep.subr.mxu0 0.0
        %443 = vmatpush1.msra.mxu0 0.0
        %444 = vmatprep.subr.mxu0 0.0
        %445 = vmatpush1.msra.mxu0 0.0
        %446 = vmatprep.subr.mxu0 0.0
        %447 = vmatpush1.msra.mxu0 0.0
        %448 = vmatprep.subr.mxu0 0.0
        %449 = vmatpush1.msra.mxu0 0.0
        %450 = vmatprep.subr.mxu0 0.0
        %451 = vmatpush1.msra.mxu0 0.0
        %452 = vmatprep.subr.mxu0 0.0
        %453 = vmatpush1.msra.mxu0 0.0
        %454 = vmatprep.subr.mxu0 0.0
        %455 = vmatpush1.msra.mxu0 0.0
        %456 = vmatprep.subr.mxu0 0.0
        %457 = vmatpush1.msra.mxu0 0.0
        %458 = vmatprep.subr.mxu0 0.0
        %459 = vmatpush1.msra.mxu0 %v430
        %460 = vmatprep.subr.mxu0 0.0
        %461 = vmatpush1.msra.mxu0 %v429
        %462 = vmatprep.subr.mxu0 0.0
        %463 = vmatpush1.msra.mxu0 %v428
        %464 = vmatprep.subr.mxu0 0.0
        %465 = vmatpush1.msra.mxu0 %v427
        %466 = vmatprep.subr.mxu0 0.0
        %467 = vmatpush2.msra.mxu0 0.0
        %468 = vmatprep.subr.mxu0 0.0
        %469 = vmatpush2.msra.mxu0 0.0
        %470 = vmatprep.subr.mxu0 0.0
        %471 = vmatpush2.msra.mxu0 0.0
        %472 = vmatprep.subr.mxu0 0.0
        %473 = vmatpush2.msra.mxu0 0.0
        %474 = vmatprep.subr.mxu0 0.0
        %475 = vmatpush2.msra.mxu0 0.0
        %476 = vmatprep.subr.mxu0 0.0
        %477 = vmatpush2.msra.mxu0 0.0
        %478 = vmatprep.subr.mxu0 0.0
        %479 = vmatpush2.msra.mxu0 0.0
        %480 = vmatprep.subr.mxu0 0.0
        %481 = vmatpush2.msra.mxu0 0.0
        %482 = vmatprep.subr.mxu0 0.0
        %483 = vmatpush2.msra.mxu0 0.0
        %484 = vmatprep.subr.mxu0 0.0
        %485 = vmatpush2.msra.mxu0 0.0
        %486 = vmatprep.subr.mxu0 0.0
        %487 = vmatpush2.msra.mxu0 0.0
        %488 = vmatprep.subr.mxu0 0.0
        %489 = vmatpush2.msra.mxu0 0.0
        %490 = vmatprep.subr.mxu0 0.0
        %491 = vmatpush2.msra.mxu0 0.0
        %492 = vmatprep.subr.mxu0 0.0
        %493 = vmatpush2.msra.mxu0 0.0
        %494 = vmatprep.subr.mxu0 0.0
        %495 = vmatpush2.msra.mxu0 0.0
        %496 = vmatprep.subr.mxu0 0.0
        %497 = vmatpush2.msra.mxu0 0.0
        %498 = vmatprep.mubr.f32.mxu0 0.0
        %499 = vmatmul.mubr.f32.gmra.mxu0 %v432
        %v500 = vpop.f32.mrf.mxu0
        %v501 = vadd.f32 0.0, %v500
        %v502 = vpop.f32.mrf.mxu0
        %503 = vdwg.mxu0
        %vm504 = vcmask 31744
        %v506 = vsel %vm504, %v423, 0
        %v509 = vsel %vm504, %v501, 0
        %511 = vmatprep.subr.mxu0 0.0
        %512 = vmatpush1.xpose.msra.mxu0 0.0
        %513 = vmatprep.subr.mxu0 0.0
        %514 = vmatpush1.xpose.msra.mxu0 0.0
        %515 = vmatprep.subr.mxu0 0.0
        %516 = vmatpush1.xpose.msra.mxu0 0.0
        %517 = vmatprep.subr.mxu0 0.0
        %518 = vmatpush1.xpose.msra.mxu0 0.0
        %519 = vmatprep.subr.mxu0 0.0
        %520 = vmatpush1.xpose.msra.mxu0 0.0
        %521 = vmatprep.subr.mxu0 0.0
        %522 = vmatpush1.xpose.msra.mxu0 0.0
        %523 = vmatprep.subr.mxu0 0.0
        %524 = vmatpush1.xpose.msra.mxu0 0.0
        %525 = vmatprep.subr.mxu0 0.0
        %526 = vmatpush1.xpose.msra.mxu0 0.0
        %527 = vmatprep.subr.mxu0 0.0
        %528 = vmatpush1.xpose.msra.mxu0 0.0
        %529 = vmatprep.subr.mxu0 0.0
        %530 = vmatpush1.xpose.msra.mxu0 0.0
        %531 = vmatprep.subr.mxu0 0.0
        %532 = vmatpush1.xpose.msra.mxu0 0.0
        %533 = vmatprep.subr.mxu0 0.0
        %534 = vmatpush1.xpose.msra.mxu0 0.0
        %535 = vmatprep.subr.mxu0 0.0
        %536 = vmatpush1.xpose.msra.mxu0 0.0
        %537 = vmatprep.subr.mxu0 0.0
        %538 = vmatpush1.xpose.msra.mxu0 0.0
        %539 = vmatprep.subr.mxu0 0.0
        %540 = vmatpush1.xpose.msra.mxu0 0.0
        %541 = vmatprep.subr.mxu0 0.0
        %542 = vmatpush1.xpose.msra.mxu0 %v509
        %543 = vmatprep.subr.mxu0 0.0
        %544 = vmatpush2.xpose.msra.mxu0 0.0
        %545 = vmatprep.subr.mxu0 0.0
        %546 = vmatpush2.xpose.msra.mxu0 0.0
        %547 = vmatprep.subr.mxu0 0.0
        %548 = vmatpush2.xpose.msra.mxu0 0.0
        %549 = vmatprep.subr.mxu0 0.0
        %550 = vmatpush2.xpose.msra.mxu0 0.0
        %551 = vmatprep.subr.mxu0 0.0
        %552 = vmatpush2.xpose.msra.mxu0 0.0
        %553 = vmatprep.subr.mxu0 0.0
        %554 = vmatpush2.xpose.msra.mxu0 0.0
        %555 = vmatprep.subr.mxu0 0.0
        %556 = vmatpush2.xpose.msra.mxu0 0.0
        %557 = vmatprep.subr.mxu0 0.0
        %558 = vmatpush2.xpose.msra.mxu0 0.0
        %559 = vmatprep.subr.mxu0 0.0
        %560 = vmatpush2.xpose.msra.mxu0 0.0
        %561 = vmatprep.subr.mxu0 0.0
        %562 = vmatpush2.xpose.msra.mxu0 0.0
        %563 = vmatprep.subr.mxu0 0.0
        %564 = vmatpush2.xpose.msra.mxu0 0.0
        %565 = vmatprep.subr.mxu0 0.0
        %566 = vmatpush2.xpose.msra.mxu0 0.0
        %567 = vmatprep.subr.mxu0 0.0
        %568 = vmatpush2.xpose.msra.mxu0 0.0
        %569 = vmatprep.subr.mxu0 0.0
        %570 = vmatpush2.xpose.msra.mxu0 0.0
        %571 = vmatprep.subr.mxu0 0.0
        %572 = vmatpush2.xpose.msra.mxu0 0.0
        %573 = vmatprep.subr.mxu0 0.0
        %574 = vmatpush2.xpose.msra.mxu0 0.0
        %575 = vmatprep.mubr.f32.mxu0 0.0
        %576 = vmatmul.mubr.f32.gmra.mxu0 %v506
        %v577 = vpop.f32.mrf.mxu0
        %v578 = vadd.f32 0.0, %v577
        %v579 = vpop.f32.mrf.mxu0
        %580 = vdwg.mxu0
        %581 = vrot.lane.b32.xlu0 %v423, 124
        %v582 = vpop.permute.xlu0 %581
        %583 = vrot.lane.b32.xlu0 %v501, 124
        %v584 = vpop.permute.xlu0 %583
        %v585 = vsel %vm504, %v582, 0
        %v587 = vsel %vm504, %v584, 0
        %589 = vmatprep.subr.mxu0 0.0
        %590 = vmatpush1.xpose.msra.mxu0 0.0
        %591 = vmatprep.subr.mxu0 0.0
        %592 = vmatpush1.xpose.msra.mxu0 0.0
        %593 = vmatprep.subr.mxu0 0.0
        %594 = vmatpush1.xpose.msra.mxu0 0.0
        %595 = vmatprep.subr.mxu0 0.0
        %596 = vmatpush1.xpose.msra.mxu0 0.0
        %597 = vmatprep.subr.mxu0 0.0
        %598 = vmatpush1.xpose.msra.mxu0 0.0
        %599 = vmatprep.subr.mxu0 0.0
        %600 = vmatpush1.xpose.msra.mxu0 0.0
        %601 = vmatprep.subr.mxu0 0.0
        %602 = vmatpush1.xpose.msra.mxu0 0.0
        %603 = vmatprep.subr.mxu0 0.0
        %604 = vmatpush1.xpose.msra.mxu0 0.0
        %605 = vmatprep.subr.mxu0 0.0
        %606 = vmatpush1.xpose.msra.mxu0 0.0
        %607 = vmatprep.subr.mxu0 0.0
        %608 = vmatpush1.xpose.msra.mxu0 0.0
        %609 = vmatprep.subr.mxu0 0.0
        %610 = vmatpush1.xpose.msra.mxu0 0.0
        %611 = vmatprep.subr.mxu0 0.0
        %612 = vmatpush1.xpose.msra.mxu0 0.0
        %613 = vmatprep.subr.mxu0 0.0
        %614 = vmatpush1.xpose.msra.mxu0 0.0
        %615 = vmatprep.subr.mxu0 0.0
        %616 = vmatpush1.xpose.msra.mxu0 0.0
        %617 = vmatprep.subr.mxu0 0.0
        %618 = vmatpush1.xpose.msra.mxu0 0.0
        %619 = vmatprep.subr.mxu0 0.0
        %620 = vmatpush1.xpose.msra.mxu0 %v587
        %621 = vmatprep.subr.mxu0 0.0
        %622 = vmatpush2.xpose.msra.mxu0 0.0
        %623 = vmatprep.subr.mxu0 0.0
        %624 = vmatpush2.xpose.msra.mxu0 0.0
        %625 = vmatprep.subr.mxu0 0.0
        %626 = vmatpush2.xpose.msra.mxu0 0.0
        %627 = vmatprep.subr.mxu0 0.0
        %628 = vmatpush2.xpose.msra.mxu0 0.0
        %629 = vmatprep.subr.mxu0 0.0
        %630 = vmatpush2.xpose.msra.mxu0 0.0
        %631 = vmatprep.subr.mxu0 0.0
        %632 = vmatpush2.xpose.msra.mxu0 0.0
        %633 = vmatprep.subr.mxu0 0.0
        %634 = vmatpush2.xpose.msra.mxu0 0.0
        %635 = vmatprep.subr.mxu0 0.0
        %636 = vmatpush2.xpose.msra.mxu0 0.0
        %637 = vmatprep.subr.mxu0 0.0
        %638 = vmatpush2.xpose.msra.mxu0 0.0
        %639 = vmatprep.subr.mxu0 0.0
        %640 = vmatpush2.xpose.msra.mxu0 0.0
        %641 = vmatprep.subr.mxu0 0.0
        %642 = vmatpush2.xpose.msra.mxu0 0.0
        %643 = vmatprep.subr.mxu0 0.0
        %644 = vmatpush2.xpose.msra.mxu0 0.0
        %645 = vmatprep.subr.mxu0 0.0
        %646 = vmatpush2.xpose.msra.mxu0 0.0
        %647 = vmatprep.subr.mxu0 0.0
        %648 = vmatpush2.xpose.msra.mxu0 0.0
        %649 = vmatprep.subr.mxu0 0.0
        %650 = vmatpush2.xpose.msra.mxu0 0.0
        %651 = vmatprep.subr.mxu0 0.0
        %652 = vmatpush2.xpose.msra.mxu0 0.0
        %653 = vmatprep.mubr.f32.mxu0 0.0
        %654 = vmatmul.mubr.f32.gmra.mxu0 %v585
        %v655 = vpop.f32.mrf.mxu0
        %v656 = vadd.f32 0.0, %v655
        %v657 = vpop.f32.mrf.mxu0
        %658 = vdwg.mxu0
        %659 = vrot.lane.b32.xlu0 %v423, 120
        %v660 = vpop.permute.xlu0 %659
        %661 = vrot.lane.b32.xlu0 %v501, 120
        %v662 = vpop.permute.xlu0 %661
        %v663 = vsel %vm504, %v660, 0
        %v665 = vsel %vm504, %v662, 0
        %667 = vmatprep.subr.mxu0 0.0
        %668 = vmatpush1.xpose.msra.mxu0 0.0
        %669 = vmatprep.subr.mxu0 0.0
        %670 = vmatpush1.xpose.msra.mxu0 0.0
        %671 = vmatprep.subr.mxu0 0.0
        %672 = vmatpush1.xpose.msra.mxu0 0.0
        %673 = vmatprep.subr.mxu0 0.0
        %674 = vmatpush1.xpose.msra.mxu0 0.0
        %675 = vmatprep.subr.mxu0 0.0
        %676 = vmatpush1.xpose.msra.mxu0 0.0
        %677 = vmatprep.subr.mxu0 0.0
        %678 = vmatpush1.xpose.msra.mxu0 0.0
        %679 = vmatprep.subr.mxu0 0.0
        %680 = vmatpush1.xpose.msra.mxu0 0.0
        %681 = vmatprep.subr.mxu0 0.0
        %682 = vmatpush1.xpose.msra.mxu0 0.0
        %683 = vmatprep.subr.mxu0 0.0
        %684 = vmatpush1.xpose.msra.mxu0 0.0
        %685 = vmatprep.subr.mxu0 0.0
        %686 = vmatpush1.xpose.msra.mxu0 0.0
        %687 = vmatprep.subr.mxu0 0.0
        %688 = vmatpush1.xpose.msra.mxu0 0.0
        %689 = vmatprep.subr.mxu0 0.0
        %690 = vmatpush1.xpose.msra.mxu0 0.0
        %691 = vmatprep.subr.mxu0 0.0
        %692 = vmatpush1.xpose.msra.mxu0 0.0
        %693 = vmatprep.subr.mxu0 0.0
        %694 = vmatpush1.xpose.msra.mxu0 0.0
        %695 = vmatprep.subr.mxu0 0.0
        %696 = vmatpush1.xpose.msra.mxu0 0.0
        %697 = vmatprep.subr.mxu0 0.0
        %698 = vmatpush1.xpose.msra.mxu0 %v665
        %699 = vmatprep.subr.mxu0 0.0
        %700 = vmatpush2.xpose.msra.mxu0 0.0
        %701 = vmatprep.subr.mxu0 0.0
        %702 = vmatpush2.xpose.msra.mxu0 0.0
        %703 = vmatprep.subr.mxu0 0.0
        %704 = vmatpush2.xpose.msra.mxu0 0.0
        %705 = vmatprep.subr.mxu0 0.0
        %706 = vmatpush2.xpose.msra.mxu0 0.0
        %707 = vmatprep.subr.mxu0 0.0
        %708 = vmatpush2.xpose.msra.mxu0 0.0
        %709 = vmatprep.subr.mxu0 0.0
        %710 = vmatpush2.xpose.msra.mxu0 0.0
        %711 = vmatprep.subr.mxu0 0.0
        %712 = vmatpush2.xpose.msra.mxu0 0.0
        %713 = vmatprep.subr.mxu0 0.0
        %714 = vmatpush2.xpose.msra.mxu0 0.0
        %715 = vmatprep.subr.mxu0 0.0
        %716 = vmatpush2.xpose.msra.mxu0 0.0
        %717 = vmatprep.subr.mxu0 0.0
        %718 = vmatpush2.xpose.msra.mxu0 0.0
        %719 = vmatprep.subr.mxu0 0.0
        %720 = vmatpush2.xpose.msra.mxu0 0.0
        %721 = vmatprep.subr.mxu0 0.0
        %722 = vmatpush2.xpose.msra.mxu0 0.0
        %723 = vmatprep.subr.mxu0 0.0
        %724 = vmatpush2.xpose.msra.mxu0 0.0
        %725 = vmatprep.subr.mxu0 0.0
        %726 = vmatpush2.xpose.msra.mxu0 0.0
        %727 = vmatprep.subr.mxu0 0.0
        %728 = vmatpush2.xpose.msra.mxu0 0.0
        %729 = vmatprep.subr.mxu0 0.0
        %730 = vmatpush2.xpose.msra.mxu0 0.0
        %731 = vmatprep.mubr.f32.mxu0 0.0
        %732 = vmatmul.mubr.f32.gmra.mxu0 %v663
        %v733 = vpop.f32.mrf.mxu0
        %v734 = vadd.f32 0.0, %v733
        %v735 = vpop.f32.mrf.mxu0
        %736 = vdwg.mxu0
        %737 = vrot.lane.b32.xlu0 %v423, 116
        %v738 = vpop.permute.xlu0 %737
        %739 = vrot.lane.b32.xlu0 %v501, 116
        %v740 = vpop.permute.xlu0 %739
        %v741 = vsel %vm504, %v738, 0
        %v743 = vsel %vm504, %v740, 0
        %745 = vmatprep.subr.mxu0 0.0
        %746 = vmatpush1.xpose.msra.mxu0 0.0
        %747 = vmatprep.subr.mxu0 0.0
        %748 = vmatpush1.xpose.msra.mxu0 0.0
        %749 = vmatprep.subr.mxu0 0.0
        %750 = vmatpush1.xpose.msra.mxu0 0.0
        %751 = vmatprep.subr.mxu0 0.0
        %752 = vmatpush1.xpose.msra.mxu0 0.0
        %753 = vmatprep.subr.mxu0 0.0
        %754 = vmatpush1.xpose.msra.mxu0 0.0
        %755 = vmatprep.subr.mxu0 0.0
        %756 = vmatpush1.xpose.msra.mxu0 0.0
        %757 = vmatprep.subr.mxu0 0.0
        %758 = vmatpush1.xpose.msra.mxu0 0.0
        %759 = vmatprep.subr.mxu0 0.0
        %760 = vmatpush1.xpose.msra.mxu0 0.0
        %761 = vmatprep.subr.mxu0 0.0
        %762 = vmatpush1.xpose.msra.mxu0 0.0
        %763 = vmatprep.subr.mxu0 0.0
        %764 = vmatpush1.xpose.msra.mxu0 0.0
        %765 = vmatprep.subr.mxu0 0.0
        %766 = vmatpush1.xpose.msra.mxu0 0.0
        %767 = vmatprep.subr.mxu0 0.0
        %768 = vmatpush1.xpose.msra.mxu0 0.0
        %769 = vmatprep.subr.mxu0 0.0
        %770 = vmatpush1.xpose.msra.mxu0 0.0
        %771 = vmatprep.subr.mxu0 0.0
        %772 = vmatpush1.xpose.msra.mxu0 0.0
        %773 = vmatprep.subr.mxu0 0.0
        %774 = vmatpush1.xpose.msra.mxu0 0.0
        %775 = vmatprep.subr.mxu0 0.0
        %776 = vmatpush1.xpose.msra.mxu0 %v743
        %777 = vmatprep.subr.mxu0 0.0
        %778 = vmatpush2.xpose.msra.mxu0 0.0
        %779 = vmatprep.subr.mxu0 0.0
        %780 = vmatpush2.xpose.msra.mxu0 0.0
        %781 = vmatprep.subr.mxu0 0.0
        %782 = vmatpush2.xpose.msra.mxu0 0.0
        %783 = vmatprep.subr.mxu0 0.0
        %784 = vmatpush2.xpose.msra.mxu0 0.0
        %785 = vmatprep.subr.mxu0 0.0
        %786 = vmatpush2.xpose.msra.mxu0 0.0
        %787 = vmatprep.subr.mxu0 0.0
        %788 = vmatpush2.xpose.msra.mxu0 0.0
        %789 = vmatprep.subr.mxu0 0.0
        %790 = vmatpush2.xpose.msra.mxu0 0.0
        %791 = vmatprep.subr.mxu0 0.0
        %792 = vmatpush2.xpose.msra.mxu0 0.0
        %793 = vmatprep.subr.mxu0 0.0
        %794 = vmatpush2.xpose.msra.mxu0 0.0
        %795 = vmatprep.subr.mxu0 0.0
        %796 = vmatpush2.xpose.msra.mxu0 0.0
        %797 = vmatprep.subr.mxu0 0.0
        %798 = vmatpush2.xpose.msra.mxu0 0.0
        %799 = vmatprep.subr.mxu0 0.0
        %800 = vmatpush2.xpose.msra.mxu0 0.0
        %801 = vmatprep.subr.mxu0 0.0
        %802 = vmatpush2.xpose.msra.mxu0 0.0
        %803 = vmatprep.subr.mxu0 0.0
        %804 = vmatpush2.xpose.msra.mxu0 0.0
        %805 = vmatprep.subr.mxu0 0.0
        %806 = vmatpush2.xpose.msra.mxu0 0.0
        %807 = vmatprep.subr.mxu0 0.0
        %808 = vmatpush2.xpose.msra.mxu0 0.0
        %809 = vmatprep.mubr.f32.mxu0 0.0
        %810 = vmatmul.mubr.f32.gmra.mxu0 %v741
        %v811 = vpop.f32.mrf.mxu0
        %v812 = vadd.f32 0.0, %v811
        %v813 = vpop.f32.mrf.mxu0
        %814 = vdwg.mxu0
        %815 = vrot.lane.b32.xlu0 %v423, 112
        %v816 = vpop.permute.xlu0 %815
        %817 = vrot.lane.b32.xlu0 %v501, 112
        %v818 = vpop.permute.xlu0 %817
        %v819 = vsel %vm504, %v816, 0
        %v821 = vsel %vm504, %v818, 0
        %823 = vmatprep.subr.mxu0 0.0
        %824 = vmatpush1.xpose.msra.mxu0 0.0
        %825 = vmatprep.subr.mxu0 0.0
        %826 = vmatpush1.xpose.msra.mxu0 0.0
        %827 = vmatprep.subr.mxu0 0.0
        %828 = vmatpush1.xpose.msra.mxu0 0.0
        %829 = vmatprep.subr.mxu0 0.0
        %830 = vmatpush1.xpose.msra.mxu0 0.0
        %831 = vmatprep.subr.mxu0 0.0
        %832 = vmatpush1.xpose.msra.mxu0 0.0
        %833 = vmatprep.subr.mxu0 0.0
        %834 = vmatpush1.xpose.msra.mxu0 0.0
        %835 = vmatprep.subr.mxu0 0.0
        %836 = vmatpush1.xpose.msra.mxu0 0.0
        %837 = vmatprep.subr.mxu0 0.0
        %838 = vmatpush1.xpose.msra.mxu0 0.0
        %839 = vmatprep.subr.mxu0 0.0
        %840 = vmatpush1.xpose.msra.mxu0 0.0
        %841 = vmatprep.subr.mxu0 0.0
        %842 = vmatpush1.xpose.msra.mxu0 0.0
        %843 = vmatprep.subr.mxu0 0.0
        %844 = vmatpush1.xpose.msra.mxu0 0.0
        %845 = vmatprep.subr.mxu0 0.0
        %846 = vmatpush1.xpose.msra.mxu0 0.0
        %847 = vmatprep.subr.mxu0 0.0
        %848 = vmatpush1.xpose.msra.mxu0 0.0
        %849 = vmatprep.subr.mxu0 0.0
        %850 = vmatpush1.xpose.msra.mxu0 0.0
        %851 = vmatprep.subr.mxu0 0.0
        %852 = vmatpush1.xpose.msra.mxu0 0.0
        %853 = vmatprep.subr.mxu0 0.0
        %854 = vmatpush1.xpose.msra.mxu0 %v821
        %855 = vmatprep.subr.mxu0 0.0
        %856 = vmatpush2.xpose.msra.mxu0 0.0
        %857 = vmatprep.subr.mxu0 0.0
        %858 = vmatpush2.xpose.msra.mxu0 0.0
        %859 = vmatprep.subr.mxu0 0.0
        %860 = vmatpush2.xpose.msra.mxu0 0.0
        %861 = vmatprep.subr.mxu0 0.0
        %862 = vmatpush2.xpose.msra.mxu0 0.0
        %863 = vmatprep.subr.mxu0 0.0
        %864 = vmatpush2.xpose.msra.mxu0 0.0
        %865 = vmatprep.subr.mxu0 0.0
        %866 = vmatpush2.xpose.msra.mxu0 0.0
        %867 = vmatprep.subr.mxu0 0.0
        %868 = vmatpush2.xpose.msra.mxu0 0.0
        %869 = vmatprep.subr.mxu0 0.0
        %870 = vmatpush2.xpose.msra.mxu0 0.0
        %871 = vmatprep.subr.mxu0 0.0
        %872 = vmatpush2.xpose.msra.mxu0 0.0
        %873 = vmatprep.subr.mxu0 0.0
        %874 = vmatpush2.xpose.msra.mxu0 0.0
        %875 = vmatprep.subr.mxu0 0.0
        %876 = vmatpush2.xpose.msra.mxu0 0.0
        %877 = vmatprep.subr.mxu0 0.0
        %878 = vmatpush2.xpose.msra.mxu0 0.0
        %879 = vmatprep.subr.mxu0 0.0
        %880 = vmatpush2.xpose.msra.mxu0 0.0
        %881 = vmatprep.subr.mxu0 0.0
        %882 = vmatpush2.xpose.msra.mxu0 0.0
        %883 = vmatprep.subr.mxu0 0.0
        %884 = vmatpush2.xpose.msra.mxu0 0.0
        %885 = vmatprep.subr.mxu0 0.0
        %886 = vmatpush2.xpose.msra.mxu0 0.0
        %887 = vmatprep.mubr.f32.mxu0 0.0
        %888 = vmatmul.mubr.f32.gmra.mxu0 %v819
        %v889 = vpop.f32.mrf.mxu0
        %v890 = vadd.f32 0.0, %v889
        %v891 = vpop.f32.mrf.mxu0
        %892 = vdwg.mxu0
        %893 = vrot.lane.b32.xlu0 %v423, 108
        %v894 = vpop.permute.xlu0 %893
        %895 = vrot.lane.b32.xlu0 %v501, 108
        %v896 = vpop.permute.xlu0 %895
        %v897 = vsel %vm504, %v894, 0
        %v899 = vsel %vm504, %v896, 0
        %901 = vmatprep.subr.mxu0 0.0
        %902 = vmatpush1.xpose.msra.mxu0 0.0
        %903 = vmatprep.subr.mxu0 0.0
        %904 = vmatpush1.xpose.msra.mxu0 0.0
        %905 = vmatprep.subr.mxu0 0.0
        %906 = vmatpush1.xpose.msra.mxu0 0.0
        %907 = vmatprep.subr.mxu0 0.0
        %908 = vmatpush1.xpose.msra.mxu0 0.0
        %909 = vmatprep.subr.mxu0 0.0
        %910 = vmatpush1.xpose.msra.mxu0 0.0
        %911 = vmatprep.subr.mxu0 0.0
        %912 = vmatpush1.xpose.msra.mxu0 0.0
        %913 = vmatprep.subr.mxu0 0.0
        %914 = vmatpush1.xpose.msra.mxu0 0.0
        %915 = vmatprep.subr.mxu0 0.0
        %916 = vmatpush1.xpose.msra.mxu0 0.0
        %917 = vmatprep.subr.mxu0 0.0
        %918 = vmatpush1.xpose.msra.mxu0 0.0
        %919 = vmatprep.subr.mxu0 0.0
        %920 = vmatpush1.xpose.msra.mxu0 0.0
        %921 = vmatprep.subr.mxu0 0.0
        %922 = vmatpush1.xpose.msra.mxu0 0.0
        %923 = vmatprep.subr.mxu0 0.0
        %924 = vmatpush1.xpose.msra.mxu0 0.0
        %925 = vmatprep.subr.mxu0 0.0
        %926 = vmatpush1.xpose.msra.mxu0 0.0
        %927 = vmatprep.subr.mxu0 0.0
        %928 = vmatpush1.xpose.msra.mxu0 0.0
        %929 = vmatprep.subr.mxu0 0.0
        %930 = vmatpush1.xpose.msra.mxu0 0.0
        %931 = vmatprep.subr.mxu0 0.0
        %932 = vmatpush1.xpose.msra.mxu0 %v899
        %933 = vmatprep.subr.mxu0 0.0
        %934 = vmatpush2.xpose.msra.mxu0 0.0
        %935 = vmatprep.subr.mxu0 0.0
        %936 = vmatpush2.xpose.msra.mxu0 0.0
        %937 = vmatprep.subr.mxu0 0.0
        %938 = vmatpush2.xpose.msra.mxu0 0.0
        %939 = vmatprep.subr.mxu0 0.0
        %940 = vmatpush2.xpose.msra.mxu0 0.0
        %941 = vmatprep.subr.mxu0 0.0
        %942 = vmatpush2.xpose.msra.mxu0 0.0
        %943 = vmatprep.subr.mxu0 0.0
        %944 = vmatpush2.xpose.msra.mxu0 0.0
        %945 = vmatprep.subr.mxu0 0.0
        %946 = vmatpush2.xpose.msra.mxu0 0.0
        %947 = vmatprep.subr.mxu0 0.0
        %948 = vmatpush2.xpose.msra.mxu0 0.0
        %949 = vmatprep.subr.mxu0 0.0
        %950 = vmatpush2.xpose.msra.mxu0 0.0
        %951 = vmatprep.subr.mxu0 0.0
        %952 = vmatpush2.xpose.msra.mxu0 0.0
        %953 = vmatprep.subr.mxu0 0.0
        %954 = vmatpush2.xpose.msra.mxu0 0.0
        %955 = vmatprep.subr.mxu0 0.0
        %956 = vmatpush2.xpose.msra.mxu0 0.0
        %957 = vmatprep.subr.mxu0 0.0
        %958 = vmatpush2.xpose.msra.mxu0 0.0
        %959 = vmatprep.subr.mxu0 0.0
        %960 = vmatpush2.xpose.msra.mxu0 0.0
        %961 = vmatprep.subr.mxu0 0.0
        %962 = vmatpush2.xpose.msra.mxu0 0.0
        %963 = vmatprep.subr.mxu0 0.0
        %964 = vmatpush2.xpose.msra.mxu0 0.0
        %965 = vmatprep.mubr.f32.mxu0 0.0
        %966 = vmatmul.mubr.f32.gmra.mxu0 %v897
        %v967 = vpop.f32.mrf.mxu0
        %v968 = vadd.f32 0.0, %v967
        %v969 = vpop.f32.mrf.mxu0
        %970 = vdwg.mxu0
        %971 = vrot.lane.b32.xlu0 %v423, 104
        %v972 = vpop.permute.xlu0 %971
        %973 = vrot.lane.b32.xlu0 %v501, 104
        %v974 = vpop.permute.xlu0 %973
        %v975 = vsel %vm504, %v972, 0
        %v977 = vsel %vm504, %v974, 0
        %979 = vmatprep.subr.mxu0 0.0
        %980 = vmatpush1.xpose.msra.mxu0 0.0
        %981 = vmatprep.subr.mxu0 0.0
        %982 = vmatpush1.xpose.msra.mxu0 0.0
        %983 = vmatprep.subr.mxu0 0.0
        %984 = vmatpush1.xpose.msra.mxu0 0.0
        %985 = vmatprep.subr.mxu0 0.0
        %986 = vmatpush1.xpose.msra.mxu0 0.0
        %987 = vmatprep.subr.mxu0 0.0
        %988 = vmatpush1.xpose.msra.mxu0 0.0
        %989 = vmatprep.subr.mxu0 0.0
        %990 = vmatpush1.xpose.msra.mxu0 0.0
        %991 = vmatprep.subr.mxu0 0.0
        %992 = vmatpush1.xpose.msra.mxu0 0.0
        %993 = vmatprep.subr.mxu0 0.0
        %994 = vmatpush1.xpose.msra.mxu0 0.0
        %995 = vmatprep.subr.mxu0 0.0
        %996 = vmatpush1.xpose.msra.mxu0 0.0
        %997 = vmatprep.subr.mxu0 0.0
        %998 = vmatpush1.xpose.msra.mxu0 0.0
        %999 = vmatprep.subr.mxu0 0.0
        %1000 = vmatpush1.xpose.msra.mxu0 0.0
        %1001 = vmatprep.subr.mxu0 0.0
        %1002 = vmatpush1.xpose.msra.mxu0 0.0
        %1003 = vmatprep.subr.mxu0 0.0
        %1004 = vmatpush1.xpose.msra.mxu0 0.0
        %1005 = vmatprep.subr.mxu0 0.0
        %1006 = vmatpush1.xpose.msra.mxu0 0.0
        %1007 = vmatprep.subr.mxu0 0.0
        %1008 = vmatpush1.xpose.msra.mxu0 0.0
        %1009 = vmatprep.subr.mxu0 0.0
        %1010 = vmatpush1.xpose.msra.mxu0 %v977
        %1011 = vmatprep.subr.mxu0 0.0
        %1012 = vmatpush2.xpose.msra.mxu0 0.0
        %1013 = vmatprep.subr.mxu0 0.0
        %1014 = vmatpush2.xpose.msra.mxu0 0.0
        %1015 = vmatprep.subr.mxu0 0.0
        %1016 = vmatpush2.xpose.msra.mxu0 0.0
        %1017 = vmatprep.subr.mxu0 0.0
        %1018 = vmatpush2.xpose.msra.mxu0 0.0
        %1019 = vmatprep.subr.mxu0 0.0
        %1020 = vmatpush2.xpose.msra.mxu0 0.0
        %1021 = vmatprep.subr.mxu0 0.0
        %1022 = vmatpush2.xpose.msra.mxu0 0.0
        %1023 = vmatprep.subr.mxu0 0.0
        %1024 = vmatpush2.xpose.msra.mxu0 0.0
        %1025 = vmatprep.subr.mxu0 0.0
        %1026 = vmatpush2.xpose.msra.mxu0 0.0
        %1027 = vmatprep.subr.mxu0 0.0
        %1028 = vmatpush2.xpose.msra.mxu0 0.0
        %1029 = vmatprep.subr.mxu0 0.0
        %1030 = vmatpush2.xpose.msra.mxu0 0.0
        %1031 = vmatprep.subr.mxu0 0.0
        %1032 = vmatpush2.xpose.msra.mxu0 0.0
        %1033 = vmatprep.subr.mxu0 0.0
        %1034 = vmatpush2.xpose.msra.mxu0 0.0
        %1035 = vmatprep.subr.mxu0 0.0
        %1036 = vmatpush2.xpose.msra.mxu0 0.0
        %1037 = vmatprep.subr.mxu0 0.0
        %1038 = vmatpush2.xpose.msra.mxu0 0.0
        %1039 = vmatprep.subr.mxu0 0.0
        %1040 = vmatpush2.xpose.msra.mxu0 0.0
        %1041 = vmatprep.subr.mxu0 0.0
        %1042 = vmatpush2.xpose.msra.mxu0 0.0
        %1043 = vmatprep.mubr.f32.mxu0 0.0
        %1044 = vmatmul.mubr.f32.gmra.mxu0 %v975
        %v1045 = vpop.f32.mrf.mxu0
        %v1046 = vadd.f32 0.0, %v1045
        %v1047 = vpop.f32.mrf.mxu0
        %1048 = vdwg.mxu0
        %1049 = vrot.lane.b32.xlu0 %v423, 100
        %v1050 = vpop.permute.xlu0 %1049
        %1051 = vrot.lane.b32.xlu0 %v501, 100
        %v1052 = vpop.permute.xlu0 %1051
        %v1053 = vsel %vm504, %v1050, 0
        %v1055 = vsel %vm504, %v1052, 0
        %1057 = vmatprep.subr.mxu0 0.0
        %1058 = vmatpush1.xpose.msra.mxu0 0.0
        %1059 = vmatprep.subr.mxu0 0.0
        %1060 = vmatpush1.xpose.msra.mxu0 0.0
        %1061 = vmatprep.subr.mxu0 0.0
        %1062 = vmatpush1.xpose.msra.mxu0 0.0
        %1063 = vmatprep.subr.mxu0 0.0
        %1064 = vmatpush1.xpose.msra.mxu0 0.0
        %1065 = vmatprep.subr.mxu0 0.0
        %1066 = vmatpush1.xpose.msra.mxu0 0.0
        %1067 = vmatprep.subr.mxu0 0.0
        %1068 = vmatpush1.xpose.msra.mxu0 0.0
        %1069 = vmatprep.subr.mxu0 0.0
        %1070 = vmatpush1.xpose.msra.mxu0 0.0
        %1071 = vmatprep.subr.mxu0 0.0
        %1072 = vmatpush1.xpose.msra.mxu0 0.0
        %1073 = vmatprep.subr.mxu0 0.0
        %1074 = vmatpush1.xpose.msra.mxu0 0.0
        %1075 = vmatprep.subr.mxu0 0.0
        %1076 = vmatpush1.xpose.msra.mxu0 0.0
        %1077 = vmatprep.subr.mxu0 0.0
        %1078 = vmatpush1.xpose.msra.mxu0 0.0
        %1079 = vmatprep.subr.mxu0 0.0
        %1080 = vmatpush1.xpose.msra.mxu0 0.0
        %1081 = vmatprep.subr.mxu0 0.0
        %1082 = vmatpush1.xpose.msra.mxu0 0.0
        %1083 = vmatprep.subr.mxu0 0.0
        %1084 = vmatpush1.xpose.msra.mxu0 0.0
        %1085 = vmatprep.subr.mxu0 0.0
        %1086 = vmatpush1.xpose.msra.mxu0 0.0
        %1087 = vmatprep.subr.mxu0 0.0
        %1088 = vmatpush1.xpose.msra.mxu0 %v1055
        %1089 = vmatprep.subr.mxu0 0.0
        %1090 = vmatpush2.xpose.msra.mxu0 0.0
        %1091 = vmatprep.subr.mxu0 0.0
        %1092 = vmatpush2.xpose.msra.mxu0 0.0
        %1093 = vmatprep.subr.mxu0 0.0
        %1094 = vmatpush2.xpose.msra.mxu0 0.0
        %1095 = vmatprep.subr.mxu0 0.0
        %1096 = vmatpush2.xpose.msra.mxu0 0.0
        %1097 = vmatprep.subr.mxu0 0.0
        %1098 = vmatpush2.xpose.msra.mxu0 0.0
        %1099 = vmatprep.subr.mxu0 0.0
        %1100 = vmatpush2.xpose.msra.mxu0 0.0
        %1101 = vmatprep.subr.mxu0 0.0
        %1102 = vmatpush2.xpose.msra.mxu0 0.0
        %1103 = vmatprep.subr.mxu0 0.0
        %1104 = vmatpush2.xpose.msra.mxu0 0.0
        %1105 = vmatprep.subr.mxu0 0.0
        %1106 = vmatpush2.xpose.msra.mxu0 0.0
        %1107 = vmatprep.subr.mxu0 0.0
        %1108 = vmatpush2.xpose.msra.mxu0 0.0
        %1109 = vmatprep.subr.mxu0 0.0
        %1110 = vmatpush2.xpose.msra.mxu0 0.0
        %1111 = vmatprep.subr.mxu0 0.0
        %1112 = vmatpush2.xpose.msra.mxu0 0.0
        %1113 = vmatprep.subr.mxu0 0.0
        %1114 = vmatpush2.xpose.msra.mxu0 0.0
        %1115 = vmatprep.subr.mxu0 0.0
        %1116 = vmatpush2.xpose.msra.mxu0 0.0
        %1117 = vmatprep.subr.mxu0 0.0
        %1118 = vmatpush2.xpose.msra.mxu0 0.0
        %1119 = vmatprep.subr.mxu0 0.0
        %1120 = vmatpush2.xpose.msra.mxu0 0.0
        %1121 = vmatprep.mubr.f32.mxu0 0.0
        %1122 = vmatmul.mubr.f32.gmra.mxu0 %v1053
        %v1123 = vpop.f32.mrf.mxu0
        %v1124 = vadd.f32 0.0, %v1123
        %v1125 = vpop.f32.mrf.mxu0
        %1126 = vdwg.mxu0
        %vm1127 = vcmask 64512
        %v1128 = vsel %vm1127, %v578, -inf
        %1129 = vmax.xlane.f32.xlu0 %v1128
        %v1130 = vpop.xlane.xlu0 %1129
        %v1131 = vsel %vm1127, %v656, -inf
        %1132 = vmax.xlane.f32.xlu0 %v1131
        %v1133 = vpop.xlane.xlu0 %1132
        %v1134 = vsel %vm1127, %v734, -inf
        %1135 = vmax.xlane.f32.xlu0 %v1134
        %v1136 = vpop.xlane.xlu0 %1135
        %v1137 = vsel %vm1127, %v812, -inf
        %1138 = vmax.xlane.f32.xlu0 %v1137
        %v1139 = vpop.xlane.xlu0 %1138
        %v1140 = vsel %vm1127, %v890, -inf
        %1141 = vmax.xlane.f32.xlu0 %v1140
        %v1142 = vpop.xlane.xlu0 %1141
        %v1143 = vsel %vm1127, %v968, -inf
        %1144 = vmax.xlane.f32.xlu0 %v1143
        %v1145 = vpop.xlane.xlu0 %1144
        %v1146 = vsel %vm1127, %v1046, -inf
        %1147 = vmax.xlane.f32.xlu0 %v1146
        %v1148 = vpop.xlane.xlu0 %1147
        %v1149 = vsel %vm1127, %v1124, -inf
        %1150 = vmax.xlane.f32.xlu0 %v1149
        %v1151 = vpop.xlane.xlu0 %1150
        %v1152 = vsub.f32 %v578, %v1130
        %v1153 = vsub.f32 %v656, %v1133
        %v1154 = vsub.f32 %v734, %v1136
        %v1155 = vsub.f32 %v812, %v1139
        %v1156 = vsub.f32 %v890, %v1142
        %v1157 = vsub.f32 %v968, %v1145
        %v1158 = vsub.f32 %v1046, %v1148
        %v1159 = vsub.f32 %v1124, %v1151
        %v1160 = vmul.f32 %v1152, 1.442695
        %v1161 = vpow.pop %v1160
        %v1162 = vmul.f32 %v1153, 1.442695
        %v1163 = vpow.pop %v1162
        %v1164 = vmul.f32 %v1154, 1.442695
        %v1165 = vpow.pop %v1164
        %v1166 = vmul.f32 %v1155, 1.442695
        %v1167 = vpow.pop %v1166
        %v1168 = vmul.f32 %v1156, 1.442695
        %v1169 = vpow.pop %v1168
        %v1170 = vmul.f32 %v1157, 1.442695
        %v1171 = vpow.pop %v1170
        %v1172 = vmul.f32 %v1158, 1.442695
        %v1173 = vpow.pop %v1172
        %v1174 = vmul.f32 %v1159, 1.442695
        %v1175 = vpow.pop %v1174
        %v1176 = vsel %vm1127, %v1161, 0.0
        %1177 = vadd.xlane.f32.xlu0 %v1176
        %v1178 = vpop.xlane.xlu0 %1177
        %v1179 = vsel %vm1127, %v1163, 0.0
        %1180 = vadd.xlane.f32.xlu0 %v1179
        %v1181 = vpop.xlane.xlu0 %1180
        %v1182 = vsel %vm1127, %v1165, 0.0
        %1183 = vadd.xlane.f32.xlu0 %v1182
        %v1184 = vpop.xlane.xlu0 %1183
        %v1185 = vsel %vm1127, %v1167, 0.0
        %1186 = vadd.xlane.f32.xlu0 %v1185
        %v1187 = vpop.xlane.xlu0 %1186
        %v1188 = vsel %vm1127, %v1169, 0.0
        %1189 = vadd.xlane.f32.xlu0 %v1188
        %v1190 = vpop.xlane.xlu0 %1189
        %v1191 = vsel %vm1127, %v1171, 0.0
        %1192 = vadd.xlane.f32.xlu0 %v1191
        %v1193 = vpop.xlane.xlu0 %1192
        %v1194 = vsel %vm1127, %v1173, 0.0
        %1195 = vadd.xlane.f32.xlu0 %v1194
        %v1196 = vpop.xlane.xlu0 %1195
        %v1197 = vsel %vm1127, %v1175, 0.0
        %1198 = vadd.xlane.f32.xlu0 %v1197
        %v1199 = vpop.xlane.xlu0 %1198
        %v1200 = vrcp.pop %v1178
        %v1201 = vrcp.pop %v1181
        %v1202 = vrcp.pop %v1184
        %v1203 = vrcp.pop %v1187
        %v1204 = vrcp.pop %v1190
        %v1205 = vrcp.pop %v1193
        %v1206 = vrcp.pop %v1196
        %v1207 = vrcp.pop %v1199
        %v1208 = vmul.f32 %v1161, %v1200
        %v1209 = vmul.f32 %v1163, %v1201
        %v1210 = vmul.f32 %v1165, %v1202
        %v1211 = vmul.f32 %v1167, %v1203
        %v1212 = vmul.f32 %v1169, %v1204
        %v1213 = vmul.f32 %v1171, %v1205
        %v1214 = vmul.f32 %v1173, %v1206
        %v1215 = vmul.f32 %v1175, %v1207
        %v1216 = vld [vmem:[#allocation10] sm:$0xff]
        %v1217 = vld [vmem:[#allocation10 + $0x8] sm:$0xff]
        %v1218 = vld [vmem:[#allocation10 + $0x10] sm:$0xff]
        %v1219 = vld [vmem:[#allocation10 + $0x18] sm:$0xff]
        %1220 = vrot.lane.b32.xlu0 %v501, 96
        %v1221 = vpop.permute.xlu0 %1220
        %v1224 = vsel %vm1127, %v1208, 0
        %1226 = vmatprep.subr.mxu0 0.0
        %1227 = vmatpush1.msra.mxu0 0.0
        %1228 = vmatprep.subr.mxu0 0.0
        %1229 = vmatpush1.msra.mxu0 0.0
        %1230 = vmatprep.subr.mxu0 0.0
        %1231 = vmatpush1.msra.mxu0 0.0
        %1232 = vmatprep.subr.mxu0 0.0
        %1233 = vmatpush1.msra.mxu0 0.0
        %1234 = vmatprep.subr.mxu0 0.0
        %1235 = vmatpush1.msra.mxu0 0.0
        %1236 = vmatprep.subr.mxu0 0.0
        %1237 = vmatpush1.msra.mxu0 0.0
        %1238 = vmatprep.subr.mxu0 0.0
        %1239 = vmatpush1.msra.mxu0 0.0
        %1240 = vmatprep.subr.mxu0 0.0
        %1241 = vmatpush1.msra.mxu0 0.0
        %1242 = vmatprep.subr.mxu0 0.0
        %1243 = vmatpush1.msra.mxu0 0.0
        %1244 = vmatprep.subr.mxu0 0.0
        %1245 = vmatpush1.msra.mxu0 0.0
        %1246 = vmatprep.subr.mxu0 0.0
        %1247 = vmatpush1.msra.mxu0 0.0
        %1248 = vmatprep.subr.mxu0 0.0
        %1249 = vmatpush1.msra.mxu0 0.0
        %1250 = vmatprep.subr.mxu0 0.0
        %1251 = vmatpush1.msra.mxu0 0.0
        %1252 = vmatprep.subr.mxu0 0.0
        %1253 = vmatpush1.msra.mxu0 0.0
        %1254 = vmatprep.subr.mxu0 0.0
        %1255 = vmatpush1.msra.mxu0 0.0
        %1256 = vmatprep.subr.mxu0 0.0
        %1257 = vmatpush1.msra.mxu0 %v1221
        %1258 = vmatprep.subr.mxu0 0.0
        %1259 = vmatpush2.msra.mxu0 0.0
        %1260 = vmatprep.subr.mxu0 0.0
        %1261 = vmatpush2.msra.mxu0 0.0
        %1262 = vmatprep.subr.mxu0 0.0
        %1263 = vmatpush2.msra.mxu0 0.0
        %1264 = vmatprep.subr.mxu0 0.0
        %1265 = vmatpush2.msra.mxu0 0.0
        %1266 = vmatprep.subr.mxu0 0.0
        %1267 = vmatpush2.msra.mxu0 0.0
        %1268 = vmatprep.subr.mxu0 0.0
        %1269 = vmatpush2.msra.mxu0 0.0
        %1270 = vmatprep.subr.mxu0 0.0
        %1271 = vmatpush2.msra.mxu0 0.0
        %1272 = vmatprep.subr.mxu0 0.0
        %1273 = vmatpush2.msra.mxu0 0.0
        %1274 = vmatprep.subr.mxu0 0.0
        %1275 = vmatpush2.msra.mxu0 0.0
        %1276 = vmatprep.subr.mxu0 0.0
        %1277 = vmatpush2.msra.mxu0 0.0
        %1278 = vmatprep.subr.mxu0 0.0
        %1279 = vmatpush2.msra.mxu0 0.0
        %1280 = vmatprep.subr.mxu0 0.0
        %1281 = vmatpush2.msra.mxu0 0.0
        %1282 = vmatprep.subr.mxu0 0.0
        %1283 = vmatpush2.msra.mxu0 0.0
        %1284 = vmatprep.subr.mxu0 0.0
        %1285 = vmatpush2.msra.mxu0 0.0
        %1286 = vmatprep.subr.mxu0 0.0
        %1287 = vmatpush2.msra.mxu0 0.0
        %1288 = vmatprep.subr.mxu0 0.0
        %1289 = vmatpush2.msra.mxu0 0.0
        %1290 = vmatprep.mubr.f32.mxu0 0.0
        %1291 = vmatmul.mubr.f32.gmra.mxu0 %v1224
        %v1292 = vpop.f32.mrf.mxu0
        %v1293 = vadd.f32 0.0, %v1292
        %v1294 = vpop.f32.mrf.mxu0
        %1295 = vdwg.mxu0
        %1296 = vrot.lane.b32.xlu0 %v501, 92
        %v1297 = vpop.permute.xlu0 %1296
        %v1300 = vsel %vm1127, %v1209, 0
        %1302 = vmatprep.subr.mxu0 0.0
        %1303 = vmatpush1.msra.mxu0 0.0
        %1304 = vmatprep.subr.mxu0 0.0
        %1305 = vmatpush1.msra.mxu0 0.0
        %1306 = vmatprep.subr.mxu0 0.0
        %1307 = vmatpush1.msra.mxu0 0.0
        %1308 = vmatprep.subr.mxu0 0.0
        %1309 = vmatpush1.msra.mxu0 0.0
        %1310 = vmatprep.subr.mxu0 0.0
        %1311 = vmatpush1.msra.mxu0 0.0
        %1312 = vmatprep.subr.mxu0 0.0
        %1313 = vmatpush1.msra.mxu0 0.0
        %1314 = vmatprep.subr.mxu0 0.0
        %1315 = vmatpush1.msra.mxu0 0.0
        %1316 = vmatprep.subr.mxu0 0.0
        %1317 = vmatpush1.msra.mxu0 0.0
        %1318 = vmatprep.subr.mxu0 0.0
        %1319 = vmatpush1.msra.mxu0 0.0
        %1320 = vmatprep.subr.mxu0 0.0
        %1321 = vmatpush1.msra.mxu0 0.0
        %1322 = vmatprep.subr.mxu0 0.0
        %1323 = vmatpush1.msra.mxu0 0.0
        %1324 = vmatprep.subr.mxu0 0.0
        %1325 = vmatpush1.msra.mxu0 0.0
        %1326 = vmatprep.subr.mxu0 0.0
        %1327 = vmatpush1.msra.mxu0 0.0
        %1328 = vmatprep.subr.mxu0 0.0
        %1329 = vmatpush1.msra.mxu0 0.0
        %1330 = vmatprep.subr.mxu0 0.0
        %1331 = vmatpush1.msra.mxu0 0.0
        %1332 = vmatprep.subr.mxu0 0.0
        %1333 = vmatpush1.msra.mxu0 %v1297
        %1334 = vmatprep.subr.mxu0 0.0
        %1335 = vmatpush2.msra.mxu0 0.0
        %1336 = vmatprep.subr.mxu0 0.0
        %1337 = vmatpush2.msra.mxu0 0.0
        %1338 = vmatprep.subr.mxu0 0.0
        %1339 = vmatpush2.msra.mxu0 0.0
        %1340 = vmatprep.subr.mxu0 0.0
        %1341 = vmatpush2.msra.mxu0 0.0
        %1342 = vmatprep.subr.mxu0 0.0
        %1343 = vmatpush2.msra.mxu0 0.0
        %1344 = vmatprep.subr.mxu0 0.0
        %1345 = vmatpush2.msra.mxu0 0.0
        %1346 = vmatprep.subr.mxu0 0.0
        %1347 = vmatpush2.msra.mxu0 0.0
        %1348 = vmatprep.subr.mxu0 0.0
        %1349 = vmatpush2.msra.mxu0 0.0
        %1350 = vmatprep.subr.mxu0 0.0
        %1351 = vmatpush2.msra.mxu0 0.0
        %1352 = vmatprep.subr.mxu0 0.0
        %1353 = vmatpush2.msra.mxu0 0.0
        %1354 = vmatprep.subr.mxu0 0.0
        %1355 = vmatpush2.msra.mxu0 0.0
        %1356 = vmatprep.subr.mxu0 0.0
        %1357 = vmatpush2.msra.mxu0 0.0
        %1358 = vmatprep.subr.mxu0 0.0
        %1359 = vmatpush2.msra.mxu0 0.0
        %1360 = vmatprep.subr.mxu0 0.0
        %1361 = vmatpush2.msra.mxu0 0.0
        %1362 = vmatprep.subr.mxu0 0.0
        %1363 = vmatpush2.msra.mxu0 0.0
        %1364 = vmatprep.subr.mxu0 0.0
        %1365 = vmatpush2.msra.mxu0 0.0
        %1366 = vmatprep.mubr.f32.mxu0 0.0
        %1367 = vmatmul.mubr.f32.gmra.mxu0 %v1300
        %v1368 = vpop.f32.mrf.mxu0
        %v1369 = vadd.f32 0.0, %v1368
        %v1370 = vpop.f32.mrf.mxu0
        %1371 = vdwg.mxu0
        %v1373 = vrot.slane %v1216, 4
        %v1375 = vsel %vm504, %v1369, 0
        %vm1377 = vcmask 1043456
        %v1378 = vsel %vm1377, %v1373, 0
        %1380 = vmatprep.subr.mxu0 0.0
        %1381 = vmatpush1.msra.mxu0 0.0
        %1382 = vmatprep.subr.mxu0 0.0
        %1383 = vmatpush1.msra.mxu0 0.0
        %1384 = vmatprep.subr.mxu0 0.0
        %1385 = vmatpush1.msra.mxu0 0.0
        %1386 = vmatprep.subr.mxu0 0.0
        %1387 = vmatpush1.msra.mxu0 0.0
        %1388 = vmatprep.subr.mxu0 0.0
        %1389 = vmatpush1.msra.mxu0 0.0
        %1390 = vmatprep.subr.mxu0 0.0
        %1391 = vmatpush1.msra.mxu0 0.0
        %1392 = vmatprep.subr.mxu0 0.0
        %1393 = vmatpush1.msra.mxu0 0.0
        %1394 = vmatprep.subr.mxu0 0.0
        %1395 = vmatpush1.msra.mxu0 0.0
        %1396 = vmatprep.subr.mxu0 0.0
        %1397 = vmatpush1.msra.mxu0 0.0
        %1398 = vmatprep.subr.mxu0 0.0
        %1399 = vmatpush1.msra.mxu0 0.0
        %1400 = vmatprep.subr.mxu0 0.0
        %1401 = vmatpush1.msra.mxu0 0.0
        %1402 = vmatprep.subr.mxu0 0.0
        %1403 = vmatpush1.msra.mxu0 0.0
        %1404 = vmatprep.subr.mxu0 0.0
        %1405 = vmatpush1.msra.mxu0 0.0
        %1406 = vmatprep.subr.mxu0 0.0
        %1407 = vmatpush1.msra.mxu0 0.0
        %1408 = vmatprep.subr.mxu0 0.0
        %1409 = vmatpush1.msra.mxu0 0.0
        %1410 = vmatprep.subr.mxu0 0.0
        %1411 = vmatpush1.msra.mxu0 %v1378
        %1412 = vmatprep.subr.mxu0 0.0
        %1413 = vmatpush2.msra.mxu0 0.0
        %1414 = vmatprep.subr.mxu0 0.0
        %1415 = vmatpush2.msra.mxu0 0.0
        %1416 = vmatprep.subr.mxu0 0.0
        %1417 = vmatpush2.msra.mxu0 0.0
        %1418 = vmatprep.subr.mxu0 0.0
        %1419 = vmatpush2.msra.mxu0 0.0
        %1420 = vmatprep.subr.mxu0 0.0
        %1421 = vmatpush2.msra.mxu0 0.0
        %1422 = vmatprep.subr.mxu0 0.0
        %1423 = vmatpush2.msra.mxu0 0.0
        %1424 = vmatprep.subr.mxu0 0.0
        %1425 = vmatpush2.msra.mxu0 0.0
        %1426 = vmatprep.subr.mxu0 0.0
        %1427 = vmatpush2.msra.mxu0 0.0
        %1428 = vmatprep.subr.mxu0 0.0
        %1429 = vmatpush2.msra.mxu0 0.0
        %1430 = vmatprep.subr.mxu0 0.0
        %1431 = vmatpush2.msra.mxu0 0.0
        %1432 = vmatprep.subr.mxu0 0.0
        %1433 = vmatpush2.msra.mxu0 0.0
        %1434 = vmatprep.subr.mxu0 0.0
        %1435 = vmatpush2.msra.mxu0 0.0
        %1436 = vmatprep.subr.mxu0 0.0
        %1437 = vmatpush2.msra.mxu0 0.0
        %1438 = vmatprep.subr.mxu0 0.0
        %1439 = vmatpush2.msra.mxu0 0.0
        %1440 = vmatprep.subr.mxu0 0.0
        %1441 = vmatpush2.msra.mxu0 0.0
        %1442 = vmatprep.subr.mxu0 0.0
        %1443 = vmatpush2.msra.mxu0 0.0
        %1444 = vmatprep.mubr.f32.mxu0 0.0
        %1445 = vmatmul.mubr.f32.gmra.mxu0 %v1375
        %v1446 = vpop.f32.mrf.mxu0
        %v1447 = vadd.f32 0.0, %v1446
        %v1448 = vpop.f32.mrf.mxu0
        %1449 = vdwg.mxu0
        %v1451 = vsel %vm504, %v1293, 0
        %v1453 = vsel %vm1377, %v1216, 0
        %1455 = vmatprep.subr.mxu0 0.0
        %1456 = vmatpush1.msra.mxu0 0.0
        %1457 = vmatprep.subr.mxu0 0.0
        %1458 = vmatpush1.msra.mxu0 0.0
        %1459 = vmatprep.subr.mxu0 0.0
        %1460 = vmatpush1.msra.mxu0 0.0
        %1461 = vmatprep.subr.mxu0 0.0
        %1462 = vmatpush1.msra.mxu0 0.0
        %1463 = vmatprep.subr.mxu0 0.0
        %1464 = vmatpush1.msra.mxu0 0.0
        %1465 = vmatprep.subr.mxu0 0.0
        %1466 = vmatpush1.msra.mxu0 0.0
        %1467 = vmatprep.subr.mxu0 0.0
        %1468 = vmatpush1.msra.mxu0 0.0
        %1469 = vmatprep.subr.mxu0 0.0
        %1470 = vmatpush1.msra.mxu0 0.0
        %1471 = vmatprep.subr.mxu0 0.0
        %1472 = vmatpush1.msra.mxu0 0.0
        %1473 = vmatprep.subr.mxu0 0.0
        %1474 = vmatpush1.msra.mxu0 0.0
        %1475 = vmatprep.subr.mxu0 0.0
        %1476 = vmatpush1.msra.mxu0 0.0
        %1477 = vmatprep.subr.mxu0 0.0
        %1478 = vmatpush1.msra.mxu0 0.0
        %1479 = vmatprep.subr.mxu0 0.0
        %1480 = vmatpush1.msra.mxu0 0.0
        %1481 = vmatprep.subr.mxu0 0.0
        %1482 = vmatpush1.msra.mxu0 0.0
        %1483 = vmatprep.subr.mxu0 0.0
        %1484 = vmatpush1.msra.mxu0 0.0
        %1485 = vmatprep.subr.mxu0 0.0
        %1486 = vmatpush1.msra.mxu0 %v1453
        %1487 = vmatprep.subr.mxu0 0.0
        %1488 = vmatpush2.msra.mxu0 0.0
        %1489 = vmatprep.subr.mxu0 0.0
        %1490 = vmatpush2.msra.mxu0 0.0
        %1491 = vmatprep.subr.mxu0 0.0
        %1492 = vmatpush2.msra.mxu0 0.0
        %1493 = vmatprep.subr.mxu0 0.0
        %1494 = vmatpush2.msra.mxu0 0.0
        %1495 = vmatprep.subr.mxu0 0.0
        %1496 = vmatpush2.msra.mxu0 0.0
        %1497 = vmatprep.subr.mxu0 0.0
        %1498 = vmatpush2.msra.mxu0 0.0
        %1499 = vmatprep.subr.mxu0 0.0
        %1500 = vmatpush2.msra.mxu0 0.0
        %1501 = vmatprep.subr.mxu0 0.0
        %1502 = vmatpush2.msra.mxu0 0.0
        %1503 = vmatprep.subr.mxu0 0.0
        %1504 = vmatpush2.msra.mxu0 0.0
        %1505 = vmatprep.subr.mxu0 0.0
        %1506 = vmatpush2.msra.mxu0 0.0
        %1507 = vmatprep.subr.mxu0 0.0
        %1508 = vmatpush2.msra.mxu0 0.0
        %1509 = vmatprep.subr.mxu0 0.0
        %1510 = vmatpush2.msra.mxu0 0.0
        %1511 = vmatprep.subr.mxu0 0.0
        %1512 = vmatpush2.msra.mxu0 0.0
        %1513 = vmatprep.subr.mxu0 0.0
        %1514 = vmatpush2.msra.mxu0 0.0
        %1515 = vmatprep.subr.mxu0 0.0
        %1516 = vmatpush2.msra.mxu0 0.0
        %1517 = vmatprep.subr.mxu0 0.0
        %1518 = vmatpush2.msra.mxu0 0.0
        %1519 = vmatprep.mubr.f32.mxu0 0.0
        %1520 = vmatmul.mubr.f32.gmra.mxu0 %v1451
        %v1521 = vpop.f32.mrf.mxu0
        %v1522 = vadd.f32 %v1447, %v1521
        %v1523 = vpop.f32.mrf.mxu0
        %1524 = vdwg.mxu0
        %1525 = vrot.lane.b32.xlu0 %v501, 88
        %v1526 = vpop.permute.xlu0 %1525
        %v1529 = vsel %vm1127, %v1210, 0
        %1531 = vmatprep.subr.mxu0 0.0
        %1532 = vmatpush1.msra.mxu0 0.0
        %1533 = vmatprep.subr.mxu0 0.0
        %1534 = vmatpush1.msra.mxu0 0.0
        %1535 = vmatprep.subr.mxu0 0.0
        %1536 = vmatpush1.msra.mxu0 0.0
        %1537 = vmatprep.subr.mxu0 0.0
        %1538 = vmatpush1.msra.mxu0 0.0
        %1539 = vmatprep.subr.mxu0 0.0
        %1540 = vmatpush1.msra.mxu0 0.0
        %1541 = vmatprep.subr.mxu0 0.0
        %1542 = vmatpush1.msra.mxu0 0.0
        %1543 = vmatprep.subr.mxu0 0.0
        %1544 = vmatpush1.msra.mxu0 0.0
        %1545 = vmatprep.subr.mxu0 0.0
        %1546 = vmatpush1.msra.mxu0 0.0
        %1547 = vmatprep.subr.mxu0 0.0
        %1548 = vmatpush1.msra.mxu0 0.0
        %1549 = vmatprep.subr.mxu0 0.0
        %1550 = vmatpush1.msra.mxu0 0.0
        %1551 = vmatprep.subr.mxu0 0.0
        %1552 = vmatpush1.msra.mxu0 0.0
        %1553 = vmatprep.subr.mxu0 0.0
        %1554 = vmatpush1.msra.mxu0 0.0
        %1555 = vmatprep.subr.mxu0 0.0
        %1556 = vmatpush1.msra.mxu0 0.0
        %1557 = vmatprep.subr.mxu0 0.0
        %1558 = vmatpush1.msra.mxu0 0.0
        %1559 = vmatprep.subr.mxu0 0.0
        %1560 = vmatpush1.msra.mxu0 0.0
        %1561 = vmatprep.subr.mxu0 0.0
        %1562 = vmatpush1.msra.mxu0 %v1526
        %1563 = vmatprep.subr.mxu0 0.0
        %1564 = vmatpush2.msra.mxu0 0.0
        %1565 = vmatprep.subr.mxu0 0.0
        %1566 = vmatpush2.msra.mxu0 0.0
        %1567 = vmatprep.subr.mxu0 0.0
        %1568 = vmatpush2.msra.mxu0 0.0
        %1569 = vmatprep.subr.mxu0 0.0
        %1570 = vmatpush2.msra.mxu0 0.0
        %1571 = vmatprep.subr.mxu0 0.0
        %1572 = vmatpush2.msra.mxu0 0.0
        %1573 = vmatprep.subr.mxu0 0.0
        %1574 = vmatpush2.msra.mxu0 0.0
        %1575 = vmatprep.subr.mxu0 0.0
        %1576 = vmatpush2.msra.mxu0 0.0
        %1577 = vmatprep.subr.mxu0 0.0
        %1578 = vmatpush2.msra.mxu0 0.0
        %1579 = vmatprep.subr.mxu0 0.0
        %1580 = vmatpush2.msra.mxu0 0.0
        %1581 = vmatprep.subr.mxu0 0.0
        %1582 = vmatpush2.msra.mxu0 0.0
        %1583 = vmatprep.subr.mxu0 0.0
        %1584 = vmatpush2.msra.mxu0 0.0
        %1585 = vmatprep.subr.mxu0 0.0
        %1586 = vmatpush2.msra.mxu0 0.0
        %1587 = vmatprep.subr.mxu0 0.0
        %1588 = vmatpush2.msra.mxu0 0.0
        %1589 = vmatprep.subr.mxu0 0.0
        %1590 = vmatpush2.msra.mxu0 0.0
        %1591 = vmatprep.subr.mxu0 0.0
        %1592 = vmatpush2.msra.mxu0 0.0
        %1593 = vmatprep.subr.mxu0 0.0
        %1594 = vmatpush2.msra.mxu0 0.0
        %1595 = vmatprep.mubr.f32.mxu0 0.0
        %1596 = vmatmul.mubr.f32.gmra.mxu0 %v1529
        %v1597 = vpop.f32.mrf.mxu0
        %v1598 = vadd.f32 0.0, %v1597
        %v1599 = vpop.f32.mrf.mxu0
        %1600 = vdwg.mxu0
        %v1602 = vsel %vm504, %v1598, 0
        %v1605 = vsel %vm1377, %v1217, 0
        %1607 = vmatprep.subr.mxu0 0.0
        %1608 = vmatpush1.msra.mxu0 0.0
        %1609 = vmatprep.subr.mxu0 0.0
        %1610 = vmatpush1.msra.mxu0 0.0
        %1611 = vmatprep.subr.mxu0 0.0
        %1612 = vmatpush1.msra.mxu0 0.0
        %1613 = vmatprep.subr.mxu0 0.0
        %1614 = vmatpush1.msra.mxu0 0.0
        %1615 = vmatprep.subr.mxu0 0.0
        %1616 = vmatpush1.msra.mxu0 0.0
        %1617 = vmatprep.subr.mxu0 0.0
        %1618 = vmatpush1.msra.mxu0 0.0
        %1619 = vmatprep.subr.mxu0 0.0
        %1620 = vmatpush1.msra.mxu0 0.0
        %1621 = vmatprep.subr.mxu0 0.0
        %1622 = vmatpush1.msra.mxu0 0.0
        %1623 = vmatprep.subr.mxu0 0.0
        %1624 = vmatpush1.msra.mxu0 0.0
        %1625 = vmatprep.subr.mxu0 0.0
        %1626 = vmatpush1.msra.mxu0 0.0
        %1627 = vmatprep.subr.mxu0 0.0
        %1628 = vmatpush1.msra.mxu0 0.0
        %1629 = vmatprep.subr.mxu0 0.0
        %1630 = vmatpush1.msra.mxu0 0.0
        %1631 = vmatprep.subr.mxu0 0.0
        %1632 = vmatpush1.msra.mxu0 0.0
        %1633 = vmatprep.subr.mxu0 0.0
        %1634 = vmatpush1.msra.mxu0 0.0
        %1635 = vmatprep.subr.mxu0 0.0
        %1636 = vmatpush1.msra.mxu0 0.0
        %1637 = vmatprep.subr.mxu0 0.0
        %1638 = vmatpush1.msra.mxu0 %v1605
        %1639 = vmatprep.subr.mxu0 0.0
        %1640 = vmatpush2.msra.mxu0 0.0
        %1641 = vmatprep.subr.mxu0 0.0
        %1642 = vmatpush2.msra.mxu0 0.0
        %1643 = vmatprep.subr.mxu0 0.0
        %1644 = vmatpush2.msra.mxu0 0.0
        %1645 = vmatprep.subr.mxu0 0.0
        %1646 = vmatpush2.msra.mxu0 0.0
        %1647 = vmatprep.subr.mxu0 0.0
        %1648 = vmatpush2.msra.mxu0 0.0
        %1649 = vmatprep.subr.mxu0 0.0
        %1650 = vmatpush2.msra.mxu0 0.0
        %1651 = vmatprep.subr.mxu0 0.0
        %1652 = vmatpush2.msra.mxu0 0.0
        %1653 = vmatprep.subr.mxu0 0.0
        %1654 = vmatpush2.msra.mxu0 0.0
        %1655 = vmatprep.subr.mxu0 0.0
        %1656 = vmatpush2.msra.mxu0 0.0
        %1657 = vmatprep.subr.mxu0 0.0
        %1658 = vmatpush2.msra.mxu0 0.0
        %1659 = vmatprep.subr.mxu0 0.0
        %1660 = vmatpush2.msra.mxu0 0.0
        %1661 = vmatprep.subr.mxu0 0.0
        %1662 = vmatpush2.msra.mxu0 0.0
        %1663 = vmatprep.subr.mxu0 0.0
        %1664 = vmatpush2.msra.mxu0 0.0
        %1665 = vmatprep.subr.mxu0 0.0
        %1666 = vmatpush2.msra.mxu0 0.0
        %1667 = vmatprep.subr.mxu0 0.0
        %1668 = vmatpush2.msra.mxu0 0.0
        %1669 = vmatprep.subr.mxu0 0.0
        %1670 = vmatpush2.msra.mxu0 0.0
        %1671 = vmatprep.mubr.f32.mxu0 0.0
        %1672 = vmatmul.mubr.f32.gmra.mxu0 %v1602
        %v1673 = vpop.f32.mrf.mxu0
        %v1674 = vadd.f32 0.0, %v1673
        %v1675 = vpop.f32.mrf.mxu0
        %1676 = vdwg.mxu0
        %v1677 = vadd.f32 %v1522, %v1674
        %1678 = vrot.lane.b32.xlu0 %v501, 84
        %v1679 = vpop.permute.xlu0 %1678
        %v1682 = vsel %vm1127, %v1211, 0
        %1684 = vmatprep.subr.mxu0 0.0
        %1685 = vmatpush1.msra.mxu0 0.0
        %1686 = vmatprep.subr.mxu0 0.0
        %1687 = vmatpush1.msra.mxu0 0.0
        %1688 = vmatprep.subr.mxu0 0.0
        %1689 = vmatpush1.msra.mxu0 0.0
        %1690 = vmatprep.subr.mxu0 0.0
        %1691 = vmatpush1.msra.mxu0 0.0
        %1692 = vmatprep.subr.mxu0 0.0
        %1693 = vmatpush1.msra.mxu0 0.0
        %1694 = vmatprep.subr.mxu0 0.0
        %1695 = vmatpush1.msra.mxu0 0.0
        %1696 = vmatprep.subr.mxu0 0.0
        %1697 = vmatpush1.msra.mxu0 0.0
        %1698 = vmatprep.subr.mxu0 0.0
        %1699 = vmatpush1.msra.mxu0 0.0
        %1700 = vmatprep.subr.mxu0 0.0
        %1701 = vmatpush1.msra.mxu0 0.0
        %1702 = vmatprep.subr.mxu0 0.0
        %1703 = vmatpush1.msra.mxu0 0.0
        %1704 = vmatprep.subr.mxu0 0.0
        %1705 = vmatpush1.msra.mxu0 0.0
        %1706 = vmatprep.subr.mxu0 0.0
        %1707 = vmatpush1.msra.mxu0 0.0
        %1708 = vmatprep.subr.mxu0 0.0
        %1709 = vmatpush1.msra.mxu0 0.0
        %1710 = vmatprep.subr.mxu0 0.0
        %1711 = vmatpush1.msra.mxu0 0.0
        %1712 = vmatprep.subr.mxu0 0.0
        %1713 = vmatpush1.msra.mxu0 0.0
        %1714 = vmatprep.subr.mxu0 0.0
        %1715 = vmatpush1.msra.mxu0 %v1679
        %1716 = vmatprep.subr.mxu0 0.0
        %1717 = vmatpush2.msra.mxu0 0.0
        %1718 = vmatprep.subr.mxu0 0.0
        %1719 = vmatpush2.msra.mxu0 0.0
        %1720 = vmatprep.subr.mxu0 0.0
        %1721 = vmatpush2.msra.mxu0 0.0
        %1722 = vmatprep.subr.mxu0 0.0
        %1723 = vmatpush2.msra.mxu0 0.0
        %1724 = vmatprep.subr.mxu0 0.0
        %1725 = vmatpush2.msra.mxu0 0.0
        %1726 = vmatprep.subr.mxu0 0.0
        %1727 = vmatpush2.msra.mxu0 0.0
        %1728 = vmatprep.subr.mxu0 0.0
        %1729 = vmatpush2.msra.mxu0 0.0
        %1730 = vmatprep.subr.mxu0 0.0
        %1731 = vmatpush2.msra.mxu0 0.0
        %1732 = vmatprep.subr.mxu0 0.0
        %1733 = vmatpush2.msra.mxu0 0.0
        %1734 = vmatprep.subr.mxu0 0.0
        %1735 = vmatpush2.msra.mxu0 0.0
        %1736 = vmatprep.subr.mxu0 0.0
        %1737 = vmatpush2.msra.mxu0 0.0
        %1738 = vmatprep.subr.mxu0 0.0
        %1739 = vmatpush2.msra.mxu0 0.0
        %1740 = vmatprep.subr.mxu0 0.0
        %1741 = vmatpush2.msra.mxu0 0.0
        %1742 = vmatprep.subr.mxu0 0.0
        %1743 = vmatpush2.msra.mxu0 0.0
        %1744 = vmatprep.subr.mxu0 0.0
        %1745 = vmatpush2.msra.mxu0 0.0
        %1746 = vmatprep.subr.mxu0 0.0
        %1747 = vmatpush2.msra.mxu0 0.0
        %1748 = vmatprep.mubr.f32.mxu0 0.0
        %1749 = vmatmul.mubr.f32.gmra.mxu0 %v1682
        %v1750 = vpop.f32.mrf.mxu0
        %v1751 = vadd.f32 0.0, %v1750
        %v1752 = vpop.f32.mrf.mxu0
        %1753 = vdwg.mxu0
        %v1754 = vrot.slane %v1217, 4
        %v1756 = vsel %vm504, %v1751, 0
        %v1758 = vsel %vm1377, %v1754, 0
        %1760 = vmatprep.subr.mxu0 0.0
        %1761 = vmatpush1.msra.mxu0 0.0
        %1762 = vmatprep.subr.mxu0 0.0
        %1763 = vmatpush1.msra.mxu0 0.0
        %1764 = vmatprep.subr.mxu0 0.0
        %1765 = vmatpush1.msra.mxu0 0.0
        %1766 = vmatprep.subr.mxu0 0.0
        %1767 = vmatpush1.msra.mxu0 0.0
        %1768 = vmatprep.subr.mxu0 0.0
        %1769 = vmatpush1.msra.mxu0 0.0
        %1770 = vmatprep.subr.mxu0 0.0
        %1771 = vmatpush1.msra.mxu0 0.0
        %1772 = vmatprep.subr.mxu0 0.0
        %1773 = vmatpush1.msra.mxu0 0.0
        %1774 = vmatprep.subr.mxu0 0.0
        %1775 = vmatpush1.msra.mxu0 0.0
        %1776 = vmatprep.subr.mxu0 0.0
        %1777 = vmatpush1.msra.mxu0 0.0
        %1778 = vmatprep.subr.mxu0 0.0
        %1779 = vmatpush1.msra.mxu0 0.0
        %1780 = vmatprep.subr.mxu0 0.0
        %1781 = vmatpush1.msra.mxu0 0.0
        %1782 = vmatprep.subr.mxu0 0.0
        %1783 = vmatpush1.msra.mxu0 0.0
        %1784 = vmatprep.subr.mxu0 0.0
        %1785 = vmatpush1.msra.mxu0 0.0
        %1786 = vmatprep.subr.mxu0 0.0
        %1787 = vmatpush1.msra.mxu0 0.0
        %1788 = vmatprep.subr.mxu0 0.0
        %1789 = vmatpush1.msra.mxu0 0.0
        %1790 = vmatprep.subr.mxu0 0.0
        %1791 = vmatpush1.msra.mxu0 %v1758
        %1792 = vmatprep.subr.mxu0 0.0
        %1793 = vmatpush2.msra.mxu0 0.0
        %1794 = vmatprep.subr.mxu0 0.0
        %1795 = vmatpush2.msra.mxu0 0.0
        %1796 = vmatprep.subr.mxu0 0.0
        %1797 = vmatpush2.msra.mxu0 0.0
        %1798 = vmatprep.subr.mxu0 0.0
        %1799 = vmatpush2.msra.mxu0 0.0
        %1800 = vmatprep.subr.mxu0 0.0
        %1801 = vmatpush2.msra.mxu0 0.0
        %1802 = vmatprep.subr.mxu0 0.0
        %1803 = vmatpush2.msra.mxu0 0.0
        %1804 = vmatprep.subr.mxu0 0.0
        %1805 = vmatpush2.msra.mxu0 0.0
        %1806 = vmatprep.subr.mxu0 0.0
        %1807 = vmatpush2.msra.mxu0 0.0
        %1808 = vmatprep.subr.mxu0 0.0
        %1809 = vmatpush2.msra.mxu0 0.0
        %1810 = vmatprep.subr.mxu0 0.0
        %1811 = vmatpush2.msra.mxu0 0.0
        %1812 = vmatprep.subr.mxu0 0.0
        %1813 = vmatpush2.msra.mxu0 0.0
        %1814 = vmatprep.subr.mxu0 0.0
        %1815 = vmatpush2.msra.mxu0 0.0
        %1816 = vmatprep.subr.mxu0 0.0
        %1817 = vmatpush2.msra.mxu0 0.0
        %1818 = vmatprep.subr.mxu0 0.0
        %1819 = vmatpush2.msra.mxu0 0.0
        %1820 = vmatprep.subr.mxu0 0.0
        %1821 = vmatpush2.msra.mxu0 0.0
        %1822 = vmatprep.subr.mxu0 0.0
        %1823 = vmatpush2.msra.mxu0 0.0
        %1824 = vmatprep.mubr.f32.mxu0 0.0
        %1825 = vmatmul.mubr.f32.gmra.mxu0 %v1756
        %v1826 = vpop.f32.mrf.mxu0
        %v1827 = vadd.f32 0.0, %v1826
        %v1828 = vpop.f32.mrf.mxu0
        %1829 = vdwg.mxu0
        %v1830 = vadd.f32 %v1677, %v1827
        %1831 = vrot.lane.b32.xlu0 %v501, 80
        %v1832 = vpop.permute.xlu0 %1831
        %v1835 = vsel %vm1127, %v1212, 0
        %1837 = vmatprep.subr.mxu0 0.0
        %1838 = vmatpush1.msra.mxu0 0.0
        %1839 = vmatprep.subr.mxu0 0.0
        %1840 = vmatpush1.msra.mxu0 0.0
        %1841 = vmatprep.subr.mxu0 0.0
        %1842 = vmatpush1.msra.mxu0 0.0
        %1843 = vmatprep.subr.mxu0 0.0
        %1844 = vmatpush1.msra.mxu0 0.0
        %1845 = vmatprep.subr.mxu0 0.0
        %1846 = vmatpush1.msra.mxu0 0.0
        %1847 = vmatprep.subr.mxu0 0.0
        %1848 = vmatpush1.msra.mxu0 0.0
        %1849 = vmatprep.subr.mxu0 0.0
        %1850 = vmatpush1.msra.mxu0 0.0
        %1851 = vmatprep.subr.mxu0 0.0
        %1852 = vmatpush1.msra.mxu0 0.0
        %1853 = vmatprep.subr.mxu0 0.0
        %1854 = vmatpush1.msra.mxu0 0.0
        %1855 = vmatprep.subr.mxu0 0.0
        %1856 = vmatpush1.msra.mxu0 0.0
        %1857 = vmatprep.subr.mxu0 0.0
        %1858 = vmatpush1.msra.mxu0 0.0
        %1859 = vmatprep.subr.mxu0 0.0
        %1860 = vmatpush1.msra.mxu0 0.0
        %1861 = vmatprep.subr.mxu0 0.0
        %1862 = vmatpush1.msra.mxu0 0.0
        %1863 = vmatprep.subr.mxu0 0.0
        %1864 = vmatpush1.msra.mxu0 0.0
        %1865 = vmatprep.subr.mxu0 0.0
        %1866 = vmatpush1.msra.mxu0 0.0
        %1867 = vmatprep.subr.mxu0 0.0
        %1868 = vmatpush1.msra.mxu0 %v1832
        %1869 = vmatprep.subr.mxu0 0.0
        %1870 = vmatpush2.msra.mxu0 0.0
        %1871 = vmatprep.subr.mxu0 0.0
        %1872 = vmatpush2.msra.mxu0 0.0
        %1873 = vmatprep.subr.mxu0 0.0
        %1874 = vmatpush2.msra.mxu0 0.0
        %1875 = vmatprep.subr.mxu0 0.0
        %1876 = vmatpush2.msra.mxu0 0.0
        %1877 = vmatprep.subr.mxu0 0.0
        %1878 = vmatpush2.msra.mxu0 0.0
        %1879 = vmatprep.subr.mxu0 0.0
        %1880 = vmatpush2.msra.mxu0 0.0
        %1881 = vmatprep.subr.mxu0 0.0
        %1882 = vmatpush2.msra.mxu0 0.0
        %1883 = vmatprep.subr.mxu0 0.0
        %1884 = vmatpush2.msra.mxu0 0.0
        %1885 = vmatprep.subr.mxu0 0.0
        %1886 = vmatpush2.msra.mxu0 0.0
        %1887 = vmatprep.subr.mxu0 0.0
        %1888 = vmatpush2.msra.mxu0 0.0
        %1889 = vmatprep.subr.mxu0 0.0
        %1890 = vmatpush2.msra.mxu0 0.0
        %1891 = vmatprep.subr.mxu0 0.0
        %1892 = vmatpush2.msra.mxu0 0.0
        %1893 = vmatprep.subr.mxu0 0.0
        %1894 = vmatpush2.msra.mxu0 0.0
        %1895 = vmatprep.subr.mxu0 0.0
        %1896 = vmatpush2.msra.mxu0 0.0
        %1897 = vmatprep.subr.mxu0 0.0
        %1898 = vmatpush2.msra.mxu0 0.0
        %1899 = vmatprep.subr.mxu0 0.0
        %1900 = vmatpush2.msra.mxu0 0.0
        %1901 = vmatprep.mubr.f32.mxu0 0.0
        %1902 = vmatmul.mubr.f32.gmra.mxu0 %v1835
        %v1903 = vpop.f32.mrf.mxu0
        %v1904 = vadd.f32 0.0, %v1903
        %v1905 = vpop.f32.mrf.mxu0
        %1906 = vdwg.mxu0
        %v1908 = vsel %vm504, %v1904, 0
        %v1911 = vsel %vm1377, %v1218, 0
        %1913 = vmatprep.subr.mxu0 0.0
        %1914 = vmatpush1.msra.mxu0 0.0
        %1915 = vmatprep.subr.mxu0 0.0
        %1916 = vmatpush1.msra.mxu0 0.0
        %1917 = vmatprep.subr.mxu0 0.0
        %1918 = vmatpush1.msra.mxu0 0.0
        %1919 = vmatprep.subr.mxu0 0.0
        %1920 = vmatpush1.msra.mxu0 0.0
        %1921 = vmatprep.subr.mxu0 0.0
        %1922 = vmatpush1.msra.mxu0 0.0
        %1923 = vmatprep.subr.mxu0 0.0
        %1924 = vmatpush1.msra.mxu0 0.0
        %1925 = vmatprep.subr.mxu0 0.0
        %1926 = vmatpush1.msra.mxu0 0.0
        %1927 = vmatprep.subr.mxu0 0.0
        %1928 = vmatpush1.msra.mxu0 0.0
        %1929 = vmatprep.subr.mxu0 0.0
        %1930 = vmatpush1.msra.mxu0 0.0
        %1931 = vmatprep.subr.mxu0 0.0
        %1932 = vmatpush1.msra.mxu0 0.0
        %1933 = vmatprep.subr.mxu0 0.0
        %1934 = vmatpush1.msra.mxu0 0.0
        %1935 = vmatprep.subr.mxu0 0.0
        %1936 = vmatpush1.msra.mxu0 0.0
        %1937 = vmatprep.subr.mxu0 0.0
        %1938 = vmatpush1.msra.mxu0 0.0
        %1939 = vmatprep.subr.mxu0 0.0
        %1940 = vmatpush1.msra.mxu0 0.0
        %1941 = vmatprep.subr.mxu0 0.0
        %1942 = vmatpush1.msra.mxu0 0.0
        %1943 = vmatprep.subr.mxu0 0.0
        %1944 = vmatpush1.msra.mxu0 %v1911
        %1945 = vmatprep.subr.mxu0 0.0
        %1946 = vmatpush2.msra.mxu0 0.0
        %1947 = vmatprep.subr.mxu0 0.0
        %1948 = vmatpush2.msra.mxu0 0.0
        %1949 = vmatprep.subr.mxu0 0.0
        %1950 = vmatpush2.msra.mxu0 0.0
        %1951 = vmatprep.subr.mxu0 0.0
        %1952 = vmatpush2.msra.mxu0 0.0
        %1953 = vmatprep.subr.mxu0 0.0
        %1954 = vmatpush2.msra.mxu0 0.0
        %1955 = vmatprep.subr.mxu0 0.0
        %1956 = vmatpush2.msra.mxu0 0.0
        %1957 = vmatprep.subr.mxu0 0.0
        %1958 = vmatpush2.msra.mxu0 0.0
        %1959 = vmatprep.subr.mxu0 0.0
        %1960 = vmatpush2.msra.mxu0 0.0
        %1961 = vmatprep.subr.mxu0 0.0
        %1962 = vmatpush2.msra.mxu0 0.0
        %1963 = vmatprep.subr.mxu0 0.0
        %1964 = vmatpush2.msra.mxu0 0.0
        %1965 = vmatprep.subr.mxu0 0.0
        %1966 = vmatpush2.msra.mxu0 0.0
        %1967 = vmatprep.subr.mxu0 0.0
        %1968 = vmatpush2.msra.mxu0 0.0
        %1969 = vmatprep.subr.mxu0 0.0
        %1970 = vmatpush2.msra.mxu0 0.0
        %1971 = vmatprep.subr.mxu0 0.0
        %1972 = vmatpush2.msra.mxu0 0.0
        %1973 = vmatprep.subr.mxu0 0.0
        %1974 = vmatpush2.msra.mxu0 0.0
        %1975 = vmatprep.subr.mxu0 0.0
        %1976 = vmatpush2.msra.mxu0 0.0
        %1977 = vmatprep.mubr.f32.mxu0 0.0
        %1978 = vmatmul.mubr.f32.gmra.mxu0 %v1908
        %v1979 = vpop.f32.mrf.mxu0
        %v1980 = vadd.f32 0.0, %v1979
        %v1981 = vpop.f32.mrf.mxu0
        %1982 = vdwg.mxu0
        %v1983 = vadd.f32 %v1830, %v1980
        %1984 = vrot.lane.b32.xlu0 %v501, 76
        %v1985 = vpop.permute.xlu0 %1984
        %v1988 = vsel %vm1127, %v1213, 0
        %1990 = vmatprep.subr.mxu0 0.0
        %1991 = vmatpush1.msra.mxu0 0.0
        %1992 = vmatprep.subr.mxu0 0.0
        %1993 = vmatpush1.msra.mxu0 0.0
        %1994 = vmatprep.subr.mxu0 0.0
        %1995 = vmatpush1.msra.mxu0 0.0
        %1996 = vmatprep.subr.mxu0 0.0
        %1997 = vmatpush1.msra.mxu0 0.0
        %1998 = vmatprep.subr.mxu0 0.0
        %1999 = vmatpush1.msra.mxu0 0.0
        %2000 = vmatprep.subr.mxu0 0.0
        %2001 = vmatpush1.msra.mxu0 0.0
        %2002 = vmatprep.subr.mxu0 0.0
        %2003 = vmatpush1.msra.mxu0 0.0
        %2004 = vmatprep.subr.mxu0 0.0
        %2005 = vmatpush1.msra.mxu0 0.0
        %2006 = vmatprep.subr.mxu0 0.0
        %2007 = vmatpush1.msra.mxu0 0.0
        %2008 = vmatprep.subr.mxu0 0.0
        %2009 = vmatpush1.msra.mxu0 0.0
        %2010 = vmatprep.subr.mxu0 0.0
        %2011 = vmatpush1.msra.mxu0 0.0
        %2012 = vmatprep.subr.mxu0 0.0
        %2013 = vmatpush1.msra.mxu0 0.0
        %2014 = vmatprep.subr.mxu0 0.0
        %2015 = vmatpush1.msra.mxu0 0.0
        %2016 = vmatprep.subr.mxu0 0.0
        %2017 = vmatpush1.msra.mxu0 0.0
        %2018 = vmatprep.subr.mxu0 0.0
        %2019 = vmatpush1.msra.mxu0 0.0
        %2020 = vmatprep.subr.mxu0 0.0
        %2021 = vmatpush1.msra.mxu0 %v1985
        %2022 = vmatprep.subr.mxu0 0.0
        %2023 = vmatpush2.msra.mxu0 0.0
        %2024 = vmatprep.subr.mxu0 0.0
        %2025 = vmatpush2.msra.mxu0 0.0
        %2026 = vmatprep.subr.mxu0 0.0
        %2027 = vmatpush2.msra.mxu0 0.0
        %2028 = vmatprep.subr.mxu0 0.0
        %2029 = vmatpush2.msra.mxu0 0.0
        %2030 = vmatprep.subr.mxu0 0.0
        %2031 = vmatpush2.msra.mxu0 0.0
        %2032 = vmatprep.subr.mxu0 0.0
        %2033 = vmatpush2.msra.mxu0 0.0
        %2034 = vmatprep.subr.mxu0 0.0
        %2035 = vmatpush2.msra.mxu0 0.0
        %2036 = vmatprep.subr.mxu0 0.0
        %2037 = vmatpush2.msra.mxu0 0.0
        %2038 = vmatprep.subr.mxu0 0.0
        %2039 = vmatpush2.msra.mxu0 0.0
        %2040 = vmatprep.subr.mxu0 0.0
        %2041 = vmatpush2.msra.mxu0 0.0
        %2042 = vmatprep.subr.mxu0 0.0
        %2043 = vmatpush2.msra.mxu0 0.0
        %2044 = vmatprep.subr.mxu0 0.0
        %2045 = vmatpush2.msra.mxu0 0.0
        %2046 = vmatprep.subr.mxu0 0.0
        %2047 = vmatpush2.msra.mxu0 0.0
        %2048 = vmatprep.subr.mxu0 0.0
        %2049 = vmatpush2.msra.mxu0 0.0
        %2050 = vmatprep.subr.mxu0 0.0
        %2051 = vmatpush2.msra.mxu0 0.0
        %2052 = vmatprep.subr.mxu0 0.0
        %2053 = vmatpush2.msra.mxu0 0.0
        %2054 = vmatprep.mubr.f32.mxu0 0.0
        %2055 = vmatmul.mubr.f32.gmra.mxu0 %v1988
        %v2056 = vpop.f32.mrf.mxu0
        %v2057 = vadd.f32 0.0, %v2056
        %v2058 = vpop.f32.mrf.mxu0
        %2059 = vdwg.mxu0
        %v2060 = vrot.slane %v1218, 4
        %v2062 = vsel %vm504, %v2057, 0
        %v2064 = vsel %vm1377, %v2060, 0
        %2066 = vmatprep.subr.mxu0 0.0
        %2067 = vmatpush1.msra.mxu0 0.0
        %2068 = vmatprep.subr.mxu0 0.0
        %2069 = vmatpush1.msra.mxu0 0.0
        %2070 = vmatprep.subr.mxu0 0.0
        %2071 = vmatpush1.msra.mxu0 0.0
        %2072 = vmatprep.subr.mxu0 0.0
        %2073 = vmatpush1.msra.mxu0 0.0
        %2074 = vmatprep.subr.mxu0 0.0
        %2075 = vmatpush1.msra.mxu0 0.0
        %2076 = vmatprep.subr.mxu0 0.0
        %2077 = vmatpush1.msra.mxu0 0.0
        %2078 = vmatprep.subr.mxu0 0.0
        %2079 = vmatpush1.msra.mxu0 0.0
        %2080 = vmatprep.subr.mxu0 0.0
        %2081 = vmatpush1.msra.mxu0 0.0
        %2082 = vmatprep.subr.mxu0 0.0
        %2083 = vmatpush1.msra.mxu0 0.0
        %2084 = vmatprep.subr.mxu0 0.0
        %2085 = vmatpush1.msra.mxu0 0.0
        %2086 = vmatprep.subr.mxu0 0.0
        %2087 = vmatpush1.msra.mxu0 0.0
        %2088 = vmatprep.subr.mxu0 0.0
        %2089 = vmatpush1.msra.mxu0 0.0
        %2090 = vmatprep.subr.mxu0 0.0
        %2091 = vmatpush1.msra.mxu0 0.0
        %2092 = vmatprep.subr.mxu0 0.0
        %2093 = vmatpush1.msra.mxu0 0.0
        %2094 = vmatprep.subr.mxu0 0.0
        %2095 = vmatpush1.msra.mxu0 0.0
        %2096 = vmatprep.subr.mxu0 0.0
        %2097 = vmatpush1.msra.mxu0 %v2064
        %2098 = vmatprep.subr.mxu0 0.0
        %2099 = vmatpush2.msra.mxu0 0.0
        %2100 = vmatprep.subr.mxu0 0.0
        %2101 = vmatpush2.msra.mxu0 0.0
        %2102 = vmatprep.subr.mxu0 0.0
        %2103 = vmatpush2.msra.mxu0 0.0
        %2104 = vmatprep.subr.mxu0 0.0
        %2105 = vmatpush2.msra.mxu0 0.0
        %2106 = vmatprep.subr.mxu0 0.0
        %2107 = vmatpush2.msra.mxu0 0.0
        %2108 = vmatprep.subr.mxu0 0.0
        %2109 = vmatpush2.msra.mxu0 0.0
        %2110 = vmatprep.subr.mxu0 0.0
        %2111 = vmatpush2.msra.mxu0 0.0
        %2112 = vmatprep.subr.mxu0 0.0
        %2113 = vmatpush2.msra.mxu0 0.0
        %2114 = vmatprep.subr.mxu0 0.0
        %2115 = vmatpush2.msra.mxu0 0.0
        %2116 = vmatprep.subr.mxu0 0.0
        %2117 = vmatpush2.msra.mxu0 0.0
        %2118 = vmatprep.subr.mxu0 0.0
        %2119 = vmatpush2.msra.mxu0 0.0
        %2120 = vmatprep.subr.mxu0 0.0
        %2121 = vmatpush2.msra.mxu0 0.0
        %2122 = vmatprep.subr.mxu0 0.0
        %2123 = vmatpush2.msra.mxu0 0.0
        %2124 = vmatprep.subr.mxu0 0.0
        %2125 = vmatpush2.msra.mxu0 0.0
        %2126 = vmatprep.subr.mxu0 0.0
        %2127 = vmatpush2.msra.mxu0 0.0
        %2128 = vmatprep.subr.mxu0 0.0
        %2129 = vmatpush2.msra.mxu0 0.0
        %2130 = vmatprep.mubr.f32.mxu0 0.0
        %2131 = vmatmul.mubr.f32.gmra.mxu0 %v2062
        %v2132 = vpop.f32.mrf.mxu0
        %v2133 = vadd.f32 0.0, %v2132
        %v2134 = vpop.f32.mrf.mxu0
        %2135 = vdwg.mxu0
        %v2136 = vadd.f32 %v1983, %v2133
        %2137 = vrot.lane.b32.xlu0 %v501, 72
        %v2138 = vpop.permute.xlu0 %2137
        %v2141 = vsel %vm1127, %v1214, 0
        %2143 = vmatprep.subr.mxu0 0.0
        %2144 = vmatpush1.msra.mxu0 0.0
        %2145 = vmatprep.subr.mxu0 0.0
        %2146 = vmatpush1.msra.mxu0 0.0
        %2147 = vmatprep.subr.mxu0 0.0
        %2148 = vmatpush1.msra.mxu0 0.0
        %2149 = vmatprep.subr.mxu0 0.0
        %2150 = vmatpush1.msra.mxu0 0.0
        %2151 = vmatprep.subr.mxu0 0.0
        %2152 = vmatpush1.msra.mxu0 0.0
        %2153 = vmatprep.subr.mxu0 0.0
        %2154 = vmatpush1.msra.mxu0 0.0
        %2155 = vmatprep.subr.mxu0 0.0
        %2156 = vmatpush1.msra.mxu0 0.0
        %2157 = vmatprep.subr.mxu0 0.0
        %2158 = vmatpush1.msra.mxu0 0.0
        %2159 = vmatprep.subr.mxu0 0.0
        %2160 = vmatpush1.msra.mxu0 0.0
        %2161 = vmatprep.subr.mxu0 0.0
        %2162 = vmatpush1.msra.mxu0 0.0
        %2163 = vmatprep.subr.mxu0 0.0
        %2164 = vmatpush1.msra.mxu0 0.0
        %2165 = vmatprep.subr.mxu0 0.0
        %2166 = vmatpush1.msra.mxu0 0.0
        %2167 = vmatprep.subr.mxu0 0.0
        %2168 = vmatpush1.msra.mxu0 0.0
        %2169 = vmatprep.subr.mxu0 0.0
        %2170 = vmatpush1.msra.mxu0 0.0
        %2171 = vmatprep.subr.mxu0 0.0
        %2172 = vmatpush1.msra.mxu0 0.0
        %2173 = vmatprep.subr.mxu0 0.0
        %2174 = vmatpush1.msra.mxu0 %v2138
        %2175 = vmatprep.subr.mxu0 0.0
        %2176 = vmatpush2.msra.mxu0 0.0
        %2177 = vmatprep.subr.mxu0 0.0
        %2178 = vmatpush2.msra.mxu0 0.0
        %2179 = vmatprep.subr.mxu0 0.0
        %2180 = vmatpush2.msra.mxu0 0.0
        %2181 = vmatprep.subr.mxu0 0.0
        %2182 = vmatpush2.msra.mxu0 0.0
        %2183 = vmatprep.subr.mxu0 0.0
        %2184 = vmatpush2.msra.mxu0 0.0
        %2185 = vmatprep.subr.mxu0 0.0
        %2186 = vmatpush2.msra.mxu0 0.0
        %2187 = vmatprep.subr.mxu0 0.0
        %2188 = vmatpush2.msra.mxu0 0.0
        %2189 = vmatprep.subr.mxu0 0.0
        %2190 = vmatpush2.msra.mxu0 0.0
        %2191 = vmatprep.subr.mxu0 0.0
        %2192 = vmatpush2.msra.mxu0 0.0
        %2193 = vmatprep.subr.mxu0 0.0
        %2194 = vmatpush2.msra.mxu0 0.0
        %2195 = vmatprep.subr.mxu0 0.0
        %2196 = vmatpush2.msra.mxu0 0.0
        %2197 = vmatprep.subr.mxu0 0.0
        %2198 = vmatpush2.msra.mxu0 0.0
        %2199 = vmatprep.subr.mxu0 0.0
        %2200 = vmatpush2.msra.mxu0 0.0
        %2201 = vmatprep.subr.mxu0 0.0
        %2202 = vmatpush2.msra.mxu0 0.0
        %2203 = vmatprep.subr.mxu0 0.0
        %2204 = vmatpush2.msra.mxu0 0.0
        %2205 = vmatprep.subr.mxu0 0.0
        %2206 = vmatpush2.msra.mxu0 0.0
        %2207 = vmatprep.mubr.f32.mxu0 0.0
        %2208 = vmatmul.mubr.f32.gmra.mxu0 %v2141
        %v2209 = vpop.f32.mrf.mxu0
        %v2210 = vadd.f32 0.0, %v2209
        %v2211 = vpop.f32.mrf.mxu0
        %2212 = vdwg.mxu0
        %v2214 = vsel %vm504, %v2210, 0
        %v2217 = vsel %vm1377, %v1219, 0
        %2219 = vmatprep.subr.mxu0 0.0
        %2220 = vmatpush1.msra.mxu0 0.0
        %2221 = vmatprep.subr.mxu0 0.0
        %2222 = vmatpush1.msra.mxu0 0.0
        %2223 = vmatprep.subr.mxu0 0.0
        %2224 = vmatpush1.msra.mxu0 0.0
        %2225 = vmatprep.subr.mxu0 0.0
        %2226 = vmatpush1.msra.mxu0 0.0
        %2227 = vmatprep.subr.mxu0 0.0
        %2228 = vmatpush1.msra.mxu0 0.0
        %2229 = vmatprep.subr.mxu0 0.0
        %2230 = vmatpush1.msra.mxu0 0.0
        %2231 = vmatprep.subr.mxu0 0.0
        %2232 = vmatpush1.msra.mxu0 0.0
        %2233 = vmatprep.subr.mxu0 0.0
        %2234 = vmatpush1.msra.mxu0 0.0
        %2235 = vmatprep.subr.mxu0 0.0
        %2236 = vmatpush1.msra.mxu0 0.0
        %2237 = vmatprep.subr.mxu0 0.0
        %2238 = vmatpush1.msra.mxu0 0.0
        %2239 = vmatprep.subr.mxu0 0.0
        %2240 = vmatpush1.msra.mxu0 0.0
        %2241 = vmatprep.subr.mxu0 0.0
        %2242 = vmatpush1.msra.mxu0 0.0
        %2243 = vmatprep.subr.mxu0 0.0
        %2244 = vmatpush1.msra.mxu0 0.0
        %2245 = vmatprep.subr.mxu0 0.0
        %2246 = vmatpush1.msra.mxu0 0.0
        %2247 = vmatprep.subr.mxu0 0.0
        %2248 = vmatpush1.msra.mxu0 0.0
        %2249 = vmatprep.subr.mxu0 0.0
        %2250 = vmatpush1.msra.mxu0 %v2217
        %2251 = vmatprep.subr.mxu0 0.0
        %2252 = vmatpush2.msra.mxu0 0.0
        %2253 = vmatprep.subr.mxu0 0.0
        %2254 = vmatpush2.msra.mxu0 0.0
        %2255 = vmatprep.subr.mxu0 0.0
        %2256 = vmatpush2.msra.mxu0 0.0
        %2257 = vmatprep.subr.mxu0 0.0
        %2258 = vmatpush2.msra.mxu0 0.0
        %2259 = vmatprep.subr.mxu0 0.0
        %2260 = vmatpush2.msra.mxu0 0.0
        %2261 = vmatprep.subr.mxu0 0.0
        %2262 = vmatpush2.msra.mxu0 0.0
        %2263 = vmatprep.subr.mxu0 0.0
        %2264 = vmatpush2.msra.mxu0 0.0
        %2265 = vmatprep.subr.mxu0 0.0
        %2266 = vmatpush2.msra.mxu0 0.0
        %2267 = vmatprep.subr.mxu0 0.0
        %2268 = vmatpush2.msra.mxu0 0.0
        %2269 = vmatprep.subr.mxu0 0.0
        %2270 = vmatpush2.msra.mxu0 0.0
        %2271 = vmatprep.subr.mxu0 0.0
        %2272 = vmatpush2.msra.mxu0 0.0
        %2273 = vmatprep.subr.mxu0 0.0
        %2274 = vmatpush2.msra.mxu0 0.0
        %2275 = vmatprep.subr.mxu0 0.0
        %2276 = vmatpush2.msra.mxu0 0.0
        %2277 = vmatprep.subr.mxu0 0.0
        %2278 = vmatpush2.msra.mxu0 0.0
        %2279 = vmatprep.subr.mxu0 0.0
        %2280 = vmatpush2.msra.mxu0 0.0
        %2281 = vmatprep.subr.mxu0 0.0
        %2282 = vmatpush2.msra.mxu0 0.0
        %2283 = vmatprep.mubr.f32.mxu0 0.0
        %2284 = vmatmul.mubr.f32.gmra.mxu0 %v2214
        %v2285 = vpop.f32.mrf.mxu0
        %v2286 = vadd.f32 0.0, %v2285
        %v2287 = vpop.f32.mrf.mxu0
        %2288 = vdwg.mxu0
        %v2289 = vadd.f32 %v2136, %v2286
        %2290 = vrot.lane.b32.xlu0 %v501, 68
        %v2291 = vpop.permute.xlu0 %2290
        %v2294 = vsel %vm1127, %v1215, 0
        %2296 = vmatprep.subr.mxu0 0.0
        %2297 = vmatpush1.msra.mxu0 0.0
        %2298 = vmatprep.subr.mxu0 0.0
        %2299 = vmatpush1.msra.mxu0 0.0
        %2300 = vmatprep.subr.mxu0 0.0
        %2301 = vmatpush1.msra.mxu0 0.0
        %2302 = vmatprep.subr.mxu0 0.0
        %2303 = vmatpush1.msra.mxu0 0.0
        %2304 = vmatprep.subr.mxu0 0.0
        %2305 = vmatpush1.msra.mxu0 0.0
        %2306 = vmatprep.subr.mxu0 0.0
        %2307 = vmatpush1.msra.mxu0 0.0
        %2308 = vmatprep.subr.mxu0 0.0
        %2309 = vmatpush1.msra.mxu0 0.0
        %2310 = vmatprep.subr.mxu0 0.0
        %2311 = vmatpush1.msra.mxu0 0.0
        %2312 = vmatprep.subr.mxu0 0.0
        %2313 = vmatpush1.msra.mxu0 0.0
        %2314 = vmatprep.subr.mxu0 0.0
        %2315 = vmatpush1.msra.mxu0 0.0
        %2316 = vmatprep.subr.mxu0 0.0
        %2317 = vmatpush1.msra.mxu0 0.0
        %2318 = vmatprep.subr.mxu0 0.0
        %2319 = vmatpush1.msra.mxu0 0.0
        %2320 = vmatprep.subr.mxu0 0.0
        %2321 = vmatpush1.msra.mxu0 0.0
        %2322 = vmatprep.subr.mxu0 0.0
        %2323 = vmatpush1.msra.mxu0 0.0
        %2324 = vmatprep.subr.mxu0 0.0
        %2325 = vmatpush1.msra.mxu0 0.0
        %2326 = vmatprep.subr.mxu0 0.0
        %2327 = vmatpush1.msra.mxu0 %v2291
        %2328 = vmatprep.subr.mxu0 0.0
        %2329 = vmatpush2.msra.mxu0 0.0
        %2330 = vmatprep.subr.mxu0 0.0
        %2331 = vmatpush2.msra.mxu0 0.0
        %2332 = vmatprep.subr.mxu0 0.0
        %2333 = vmatpush2.msra.mxu0 0.0
        %2334 = vmatprep.subr.mxu0 0.0
        %2335 = vmatpush2.msra.mxu0 0.0
        %2336 = vmatprep.subr.mxu0 0.0
        %2337 = vmatpush2.msra.mxu0 0.0
        %2338 = vmatprep.subr.mxu0 0.0
        %2339 = vmatpush2.msra.mxu0 0.0
        %2340 = vmatprep.subr.mxu0 0.0
        %2341 = vmatpush2.msra.mxu0 0.0
        %2342 = vmatprep.subr.mxu0 0.0
        %2343 = vmatpush2.msra.mxu0 0.0
        %2344 = vmatprep.subr.mxu0 0.0
        %2345 = vmatpush2.msra.mxu0 0.0
        %2346 = vmatprep.subr.mxu0 0.0
        %2347 = vmatpush2.msra.mxu0 0.0
        %2348 = vmatprep.subr.mxu0 0.0
        %2349 = vmatpush2.msra.mxu0 0.0
        %2350 = vmatprep.subr.mxu0 0.0
        %2351 = vmatpush2.msra.mxu0 0.0
        %2352 = vmatprep.subr.mxu0 0.0
        %2353 = vmatpush2.msra.mxu0 0.0
        %2354 = vmatprep.subr.mxu0 0.0
        %2355 = vmatpush2.msra.mxu0 0.0
        %2356 = vmatprep.subr.mxu0 0.0
        %2357 = vmatpush2.msra.mxu0 0.0
        %2358 = vmatprep.subr.mxu0 0.0
        %2359 = vmatpush2.msra.mxu0 0.0
        %2360 = vmatprep.mubr.f32.mxu0 0.0
        %2361 = vmatmul.mubr.f32.gmra.mxu0 %v2294
        %v2362 = vpop.f32.mrf.mxu0
        %v2363 = vadd.f32 0.0, %v2362
        %v2364 = vpop.f32.mrf.mxu0
        %2365 = vdwg.mxu0
        %v2366 = vrot.slane %v1219, 4
        %v2368 = vsel %vm504, %v2363, 0
        %v2370 = vsel %vm1377, %v2366, 0
        %2372 = vmatprep.subr.mxu0 0.0
        %2373 = vmatpush1.msra.mxu0 0.0
        %2374 = vmatprep.subr.mxu0 0.0
        %2375 = vmatpush1.msra.mxu0 0.0
        %2376 = vmatprep.subr.mxu0 0.0
        %2377 = vmatpush1.msra.mxu0 0.0
        %2378 = vmatprep.subr.mxu0 0.0
        %2379 = vmatpush1.msra.mxu0 0.0
        %2380 = vmatprep.subr.mxu0 0.0
        %2381 = vmatpush1.msra.mxu0 0.0
        %2382 = vmatprep.subr.mxu0 0.0
        %2383 = vmatpush1.msra.mxu0 0.0
        %2384 = vmatprep.subr.mxu0 0.0
        %2385 = vmatpush1.msra.mxu0 0.0
        %2386 = vmatprep.subr.mxu0 0.0
        %2387 = vmatpush1.msra.mxu0 0.0
        %2388 = vmatprep.subr.mxu0 0.0
        %2389 = vmatpush1.msra.mxu0 0.0
        %2390 = vmatprep.subr.mxu0 0.0
        %2391 = vmatpush1.msra.mxu0 0.0
        %2392 = vmatprep.subr.mxu0 0.0
        %2393 = vmatpush1.msra.mxu0 0.0
        %2394 = vmatprep.subr.mxu0 0.0
        %2395 = vmatpush1.msra.mxu0 0.0
        %2396 = vmatprep.subr.mxu0 0.0
        %2397 = vmatpush1.msra.mxu0 0.0
        %2398 = vmatprep.subr.mxu0 0.0
        %2399 = vmatpush1.msra.mxu0 0.0
        %2400 = vmatprep.subr.mxu0 0.0
        %2401 = vmatpush1.msra.mxu0 0.0
        %2402 = vmatprep.subr.mxu0 0.0
        %2403 = vmatpush1.msra.mxu0 %v2370
        %2404 = vmatprep.subr.mxu0 0.0
        %2405 = vmatpush2.msra.mxu0 0.0
        %2406 = vmatprep.subr.mxu0 0.0
        %2407 = vmatpush2.msra.mxu0 0.0
        %2408 = vmatprep.subr.mxu0 0.0
        %2409 = vmatpush2.msra.mxu0 0.0
        %2410 = vmatprep.subr.mxu0 0.0
        %2411 = vmatpush2.msra.mxu0 0.0
        %2412 = vmatprep.subr.mxu0 0.0
        %2413 = vmatpush2.msra.mxu0 0.0
        %2414 = vmatprep.subr.mxu0 0.0
        %2415 = vmatpush2.msra.mxu0 0.0
        %2416 = vmatprep.subr.mxu0 0.0
        %2417 = vmatpush2.msra.mxu0 0.0
        %2418 = vmatprep.subr.mxu0 0.0
        %2419 = vmatpush2.msra.mxu0 0.0
        %2420 = vmatprep.subr.mxu0 0.0
        %2421 = vmatpush2.msra.mxu0 0.0
        %2422 = vmatprep.subr.mxu0 0.0
        %2423 = vmatpush2.msra.mxu0 0.0
        %2424 = vmatprep.subr.mxu0 0.0
        %2425 = vmatpush2.msra.mxu0 0.0
        %2426 = vmatprep.subr.mxu0 0.0
        %2427 = vmatpush2.msra.mxu0 0.0
        %2428 = vmatprep.subr.mxu0 0.0
        %2429 = vmatpush2.msra.mxu0 0.0
        %2430 = vmatprep.subr.mxu0 0.0
        %2431 = vmatpush2.msra.mxu0 0.0
        %2432 = vmatprep.subr.mxu0 0.0
        %2433 = vmatpush2.msra.mxu0 0.0
        %2434 = vmatprep.subr.mxu0 0.0
        %2435 = vmatpush2.msra.mxu0 0.0
        %2436 = vmatprep.mubr.f32.mxu0 0.0
        %2437 = vmatmul.mubr.f32.gmra.mxu0 %v2368
        %v2438 = vpop.f32.mrf.mxu0
        %v2439 = vadd.f32 0.0, %v2438
        %v2440 = vpop.f32.mrf.mxu0
        %2441 = vdwg.mxu0
        %v2442 = vadd.f32 %v2289, %v2439
        %v2443 = vld [vmem:[%s5] sm:$0x1]
        %v2445 = vlaneseq
        %v2446 = vshrl.u32 %v2445, 7
        %v2447 = vsub.s32 0, %v2446
        %v2448 = vrot.slane %v2443, %v2447
        %v2450 = vadd.f32 %v2442, %v2448
        %2451 = vst.msk [vmem:[%s346] sm:$0xff] %vm352, %v2450
        %s2452 = sand.u32 %s171, 1
        %s2453 = scalar_lea.sflag [#allocation4], %s2452
        %s2454 = sand.u32 %s171, 1
        %s2455 = smul.addr %s2454, 8
        %s2456 = scalar_lea.vmem [#allocation11], %s2455
        // Predicated region
        $region65: #{tpu_custom_call.1} parent=43 // pred_check
          %p2457 = pneg %p181
        $region66: #{tpu_custom_call.1} parent=43 // pred_check_branch
          %2459 = sbr.rel (%p2457) target = $region68
        $region67: #{tpu_custom_call.1} parent=43 // pred_region
          %s2461 = ssub.s32 128, 128
          %2462 = vsyncadd %s2453, %s2461
          %s2463 = smul.addr %s27, 128
          %s2464 = scalar_lea.hbm %s6, %s2463
          %s2466 = sshll.u32 %s2456, 4
          %s2467 = int_to_ptr.vmem [resolvable:$true] %s2466
          %2469 = dma.vmem_to_hbm [thread:$0]  %s2467, 128, %s2464, %s2453
        $region68: #{tpu_custom_call.1} parent=43 // pred_fallthru
          _
      $region44: #{tpu_custom_call.1} parent=5 // pred_fallthru
        _
      %p2470 = scmp.le.s32.totalorder 2, %s22
      // Predicated region
      $region69: #{tpu_custom_call.1} parent=5 // pred_check
        %p2471 = pneg %p2470
      $region70: #{tpu_custom_call.1} parent=5 // pred_check_branch
        %2473 = sbr.rel (%p2471) target = $region72
      $region71: #{tpu_custom_call.1} parent=5 // pred_region
        %s2474 = ssub.s32 %s22, 2
        // Predicated region
        $region73: #{tpu_custom_call.1} parent=71 // pred_check
          %p2475 = pneg %p187
        $region74: #{tpu_custom_call.1} parent=71 // pred_check_branch
          %2477 = sbr.rel (%p2475) target = $region76
        $region75: #{tpu_custom_call.1} parent=71 // pred_region
          %s2478 = sand.u32 %s172, 1
          %s2479 = scalar_lea.sflag [#allocation4], %s2478
          %s2480 = sand.u32 %s172, 1
          %s2481 = smul.addr %s2480, 8
          %s2482 = scalar_lea.vmem [#allocation11], %s2481
          %2483 = dma.done %s2479, 128
        $region76: #{tpu_custom_call.1} parent=71 // pred_fallthru
          _
      $region72: #{tpu_custom_call.1} parent=5 // pred_fallthru
        _
    $region6: #{tpu_custom_call.1} parent=1 // loop_footer
      %s26 = sadd.s32 1, %s22
    $region7: #{tpu_custom_call.1} parent=1 // loop_footer_branch
      %21 = sbr.rel target = $region3
    $region8: #{tpu_custom_call.1} parent=1 // loop_exit
      _
    %2484 = vsyncpa [#allocation3], 1
    %s2485 = scalar_lea.sflag [#allocation3], 1
    %2486 = vsyncpa %s2485, 1
    %2487 = vsyncpa [#allocation6], 1
    %s2488 = scalar_lea.sflag [#allocation6], 1
    %2489 = vsyncpa %s2488, 1
    %2490 = vsyncpa [#allocation9], 1
    %2491 = vsyncpa [#allocation4], 1
    %s2492 = scalar_lea.sflag [#allocation4], 1
    %2493 = vsyncpa %s2492, 1

</llo_original>
